<compile_context>
chip_gen: v7x
topology: tpu7x:2x2x1
jax: 0.10.0
libtpu: 0.0.40
codegen_flags: <defaults>
</compile_context>

<pallas_src>
import math
import functools

import jax
import jax.numpy as jnp
from jax.experimental import pallas as pl
from jax.experimental.pallas import tpu as pltpu

LN_EPS = 1e-5                       # torch nn.LayerNorm default
GELU_C = math.sqrt(2.0 / math.pi)


# ---------------------------------------------------------------------------
# In-kernel helpers (traced inside the Pallas body)
# ---------------------------------------------------------------------------
def _layernorm_no_affine(x):
    # gamma/beta are folded into the following projection weights at the wrapper
    mu = jnp.mean(x, axis=-1, keepdims=True)
    var = jnp.mean((x - mu) ** 2, axis=-1, keepdims=True)
    return (x - mu) * jax.lax.rsqrt(var + LN_EPS)


def _new_gelu(x):
    x3 = x * x * x                  # two VPU muls; avoids jnp.power's exp/log path
    return 0.5 * x * (1.0 + jnp.tanh(GELU_C * (x + 0.044715 * x3)))


# ---------------------------------------------------------------------------
# One grid step = one transformer block applied to one batch row.
# Grid = (batch, layer); activation carry lives in VMEM scratch across layers.
# ---------------------------------------------------------------------------
def vit_blocks_kernel(x_ref, wqkv_ref, bqkv_ref, wo_ref, bo_ref,
                      w1_ref, b1_ref, w2_ref, b2_ref, o_ref, x_sc,
                      *, num_heads, head_size, hidden):
    f32, bf16 = jnp.float32, jnp.bfloat16
    layer = pl.program_id(1)

    # layer 0: seed the VMEM-resident carry from HBM input (once per batch row)
    @pl.when(layer == 0)
    def _():
        x_sc[...] = x_ref[0]

    x = x_sc[...]                                            # (L, H) f32 carry

    # ---- attention branch (pre-LN) ------------------------------------------
    ln1 = _layernorm_no_affine(x).astype(bf16)
    # fused QKV projection (1/sqrt(head_size) pre-folded into the Q columns)
    qkv = jnp.dot(ln1, wqkv_ref[0],
                  preferred_element_type=f32) + bqkv_ref[0]  # (L, 3H) f32

    attn = x + bo_ref[0]            # residual + output-projection bias, folded
    for h in range(num_heads):      # static unroll over heads
        lo = h * head_size
        hi = lo + head_size
        qh = qkv[:, lo:hi].astype(bf16)                      # (L, hd), pre-scaled
        kh = qkv[:, hidden + lo:hidden + hi].astype(bf16)
        vh = qkv[:, 2 * hidden + lo:2 * hidden + hi].astype(bf16)

        # s[i, j] = sum_d q[i, d] * k[j, d]   (no explicit transpose)
        s = jax.lax.dot_general(qh, kh, (((1,), (1,)), ((), ())),
                                preferred_element_type=f32)  # (L, L)
        s = s - jnp.max(s, axis=-1, keepdims=True)           # stable softmax
        p = jnp.exp(s)
        inv = pl.reciprocal(jnp.sum(p, axis=-1, keepdims=True), approx=True)
        # normalize the (L, hd) context instead of the (L, L) probabilities
        ctx = jnp.dot(p.astype(bf16), vh, preferred_element_type=f32) * inv
        # accumulate the output projection per head (no concat relayout)
        attn = attn + jnp.dot(ctx.astype(bf16), wo_ref[0, h],
                              preferred_element_type=f32)    # (L, H)
    # TODO(synk): attention_probs_dropout / hidden_dropout treated as identity.
    x = attn

    # ---- MLP branch (pre-LN) -------------------------------------------------
    ln2 = _layernorm_no_affine(x).astype(bf16)
    hmid = jnp.dot(ln2, w1_ref[0], preferred_element_type=f32) + b1_ref[0]
    hmid = _new_gelu(hmid).astype(bf16)
    mlp = jnp.dot(hmid, w2_ref[0], preferred_element_type=f32) + b2_ref[0]
    out = x + mlp

    x_sc[...] = out                 # carry for the next layer (stays in VMEM)

    @pl.when(layer == pl.num_programs(1) - 1)
    def _():
        o_ref[0] = out              # single HBM writeback per batch row


# ---------------------------------------------------------------------------
# Host-side parameter preparation (done once, zero runtime cost)
# ---------------------------------------------------------------------------
def prepare_block_params(p, *, num_heads, head_size):
    """Fold LN affine + softmax scale into weights, fuse QKV, cast to bf16."""
    f32, bf16 = jnp.float32, jnp.bfloat16
    H = p["wq"].shape[0]
    scale = 1.0 / math.sqrt(head_size)

    g1, beta1 = p["ln1g"][0], p["ln1b"][0]
    wqkv_raw = jnp.concatenate([p["wq"], p["wk"], p["wv"]], axis=1)      # (H, 3H)
    bqkv = jnp.concatenate([p["bq"][0], p["bk"][0], p["bv"][0]], axis=0)
    bqkv = bqkv + beta1 @ wqkv_raw                                        # beta fold
    wqkv = g1[:, None] * wqkv_raw                                         # gamma fold
    wqkv = wqkv.at[:, :H].multiply(scale)                                 # scale into Q
    bqkv = bqkv.at[:H].multiply(scale)

    g2, beta2 = p["ln2g"][0], p["ln2b"][0]
    w1 = g2[:, None] * p["w1"]
    b1 = p["b1"][0] + beta2 @ p["w1"]

    return {
        "wqkv": wqkv.astype(bf16),
        "bqkv": bqkv[None, :].astype(f32),
        "wo": p["wo"].reshape(num_heads, head_size, H).astype(bf16),
        "bo": p["bo"].astype(f32),
        "w1": w1.astype(bf16),
        "b1": b1[None, :].astype(f32),
        "w2": p["w2"].astype(bf16),
        "b2": p["b2"].astype(f32),
    }


WEIGHT_ORDER = ("wqkv", "bqkv", "wo", "bo", "w1", "b1", "w2", "b2")


def prepare_encoder_params(layer_params, *, num_heads, head_size):
    """Per-layer prep, then stack along a leading layer axis for streaming."""
    per = [prepare_block_params(p, num_heads=num_heads, head_size=head_size)
           for p in layer_params]
    return {k: jnp.stack([pp[k] for pp in per], axis=0) for k in per[0]}


def vit_encoder(x, layer_params, *, num_heads, head_size):
    """ViTEncoder.forward(x, output_attentions=False) -> (x, []).  x: (B, L, H) f32."""
    B, L, H = x.shape
    num_layers = len(layer_params)
    sp = prepare_encoder_params(layer_params, num_heads=num_heads, head_size=head_size)
    weight_args = [sp[k] for k in WEIGHT_ORDER]

    def per_layer_spec(arr):
        block = (1,) + arr.shape[1:]
        ndim = arr.ndim
        return pl.BlockSpec(block, lambda b, l, n=ndim: (l,) + (0,) * (n - 1))

    in_specs = ([pl.BlockSpec((1, L, H), lambda b, l: (b, 0, 0))]
                + [per_layer_spec(a) for a in weight_args])

    kernel = functools.partial(vit_blocks_kernel, num_heads=num_heads,
                               head_size=head_size, hidden=H)

    out = pl.pallas_call(
        kernel,
        out_shape=jax.ShapeDtypeStruct((B, L, H), jnp.float32),
        grid_spec=pltpu.PrefetchScalarGridSpec(
            num_scalar_prefetch=0,
            grid=(B, num_layers),                     # layer = inner carry axis
            in_specs=in_specs,
            out_specs=pl.BlockSpec((1, L, H), lambda b, l: (b, 0, 0)),
            scratch_shapes=[pltpu.VMEM((L, H), jnp.float32)],   # activation carry
        ),
        compiler_params=pltpu.CompilerParams(
            # batch rows independent -> shard across v7x's two TensorCores;
            # layer axis carries the residual stream -> arbitrary.
            dimension_semantics=("parallel", "arbitrary"),
            vmem_limit_bytes=32 * 1024 * 1024,
        ),
    )(x, *weight_args)
    return out, []


# ---------------------------------------------------------------------------
# Deterministic parameter init + pure-JAX f32 reference for sanity checking
# ---------------------------------------------------------------------------
def init_block_params(key, hidden, intermediate):
    ks = jax.random.split(key, 16)
    n = lambda k, shp, s=0.02: (s * jax.random.normal(k, shp)).astype(jnp.float32)
    return {
        "ln1g": 1.0 + n(ks[0], (1, hidden), 0.1), "ln1b": n(ks[1], (1, hidden)),
        "wq": n(ks[2], (hidden, hidden)), "bq": n(ks[3], (1, hidden)),
        "wk": n(ks[4], (hidden, hidden)), "bk": n(ks[5], (1, hidden)),
        "wv": n(ks[6], (hidden, hidden)), "bv": n(ks[7], (1, hidden)),
        "wo": n(ks[8], (hidden, hidden)), "bo": n(ks[9], (1, hidden)),
        "ln2g": 1.0 + n(ks[10], (1, hidden), 0.1), "ln2b": n(ks[11], (1, hidden)),
        "w1": n(ks[12], (hidden, intermediate)), "b1": n(ks[13], (1, intermediate)),
        "w2": n(ks[14], (intermediate, hidden)), "b2": n(ks[15], (1, hidden)),
    }


def ref_block(x, p, num_heads, head_size):
    def ln(v, g, b):
        mu = v.mean(-1, keepdims=True)
        var = ((v - mu) ** 2).mean(-1, keepdims=True)
        return (v - mu) / jnp.sqrt(var + LN_EPS) * g + b

    l1 = ln(x, p["ln1g"][0], p["ln1b"][0])
    q = l1 @ p["wq"] + p["bq"][0]
    k = l1 @ p["wk"] + p["bk"][0]
    v = l1 @ p["wv"] + p["bv"][0]
    B, L, H = x.shape
    qh = q.reshape(B, L, num_heads, head_size)
    kh = k.reshape(B, L, num_heads, head_size)
    vh = v.reshape(B, L, num_heads, head_size)
    s = jnp.einsum("bqhd,bkhd->bhqk", qh, kh) / math.sqrt(head_size)
    pr = jax.nn.softmax(s, axis=-1)
    a = jnp.einsum("bhqk,bkhd->bqhd", pr, vh).reshape(B, L, H)
    a = a @ p["wo"] + p["bo"][0]
    x = x + a
    l2 = ln(x, p["ln2g"][0], p["ln2b"][0])
    h = l2 @ p["w1"] + p["b1"][0]
    h = 0.5 * h * (1.0 + jnp.tanh(math.sqrt(2.0 / math.pi) * (h + 0.044715 * h ** 3)))
    m = h @ p["w2"] + p["b2"][0]
    return x + m


if __name__ == "__main__":
    # Small config consistent with the module's forward
    B, L = 2, 8
    hidden, num_heads, intermediate, num_layers = 32, 4, 64, 2
    head_size = hidden // num_heads

    root = jax.random.PRNGKey(0)
    kx, kp = jax.random.split(root)
    x = jax.random.normal(kx, (B, L, hidden), dtype=jnp.float32)

    layer_keys = jax.random.split(kp, num_layers)
    layer_params = [init_block_params(k, hidden, intermediate) for k in layer_keys]

    out, all_attn = vit_encoder(x, layer_params,
                                num_heads=num_heads, head_size=head_size)
    out = jax.block_until_ready(out)

    # pure-JAX f32 reference check (kernel uses bf16 matmuls -> loose tolerance)
    ref = x
    for p in layer_params:
        ref = ref_block(ref, p, num_heads, head_size)
    assert jnp.allclose(out, ref, atol=2e-2, rtol=2e-2), "mismatch vs reference"

    print("KERNEL_OK")
</pallas_src>

<mosaic_0001>
module attributes {stable_mosaic.version = 11 : i64} {
  func.func @vit_blocks_kernel(%arg0: i32, %arg1: i32, %arg2: memref<1x8x32xf32, #tpu.memory_space<vmem>>, %arg3: memref<1x32x96xbf16, #tpu.memory_space<vmem>>, %arg4: memref<1x1x96xf32, #tpu.memory_space<vmem>>, %arg5: memref<1x4x8x32xbf16, #tpu.memory_space<vmem>>, %arg6: memref<1x1x32xf32, #tpu.memory_space<vmem>>, %arg7: memref<1x32x64xbf16, #tpu.memory_space<vmem>>, %arg8: memref<1x1x64xf32, #tpu.memory_space<vmem>>, %arg9: memref<1x64x32xbf16, #tpu.memory_space<vmem>>, %arg10: memref<1x1x32xf32, #tpu.memory_space<vmem>>, %arg11: memref<1x8x32xf32, #tpu.memory_space<vmem>>, %arg12: memref<8x32xf32, #tpu.memory_space<vmem>>) attributes {dimension_semantics = [#tpu.dimension_semantics<parallel>, #tpu.dimension_semantics<arbitrary>], iteration_bounds = array<i64: 2, 2>, scalar_prefetch = 0 : i64, scratch_operands = 1 : i64, tpu.core_type = #tpu.core_type<tc>, window_params = [{transform_indices = @transform_0, window_bounds = array<i64: 1, 8, 32>}, {transform_indices = @transform_1, window_bounds = array<i64: 1, 32, 96>}, {transform_indices = @transform_2, window_bounds = array<i64: 1, 1, 96>}, {transform_indices = @transform_3, window_bounds = array<i64: 1, 4, 8, 32>}, {transform_indices = @transform_4, window_bounds = array<i64: 1, 1, 32>}, {transform_indices = @transform_5, window_bounds = array<i64: 1, 32, 64>}, {transform_indices = @transform_6, window_bounds = array<i64: 1, 1, 64>}, {transform_indices = @transform_7, window_bounds = array<i64: 1, 64, 32>}, {transform_indices = @transform_8, window_bounds = array<i64: 1, 1, 32>}, {transform_indices = @transform_9, window_bounds = array<i64: 1, 8, 32>}]} {
    %c0_i32 = arith.constant 0 : i32
    %0 = arith.cmpi eq, %arg1, %c0_i32 : i32
    %1 = arith.extui %0 : i1 to i32
    %c0_i32_0 = arith.constant 0 : i32
    %2 = arith.cmpi ne, %1, %c0_i32_0 : i32
    scf.if %2 {
      %c0_75 = arith.constant 0 : index
      %c0_76 = arith.constant 0 : index
      %c0_77 = arith.constant 0 : index
      %182 = vector.load %arg2[%c0_75, %c0_76, %c0_77] : memref<1x8x32xf32, #tpu.memory_space<vmem>>, vector<1x8x32xf32>
      %183 = vector.shape_cast %182 : vector<1x8x32xf32> to vector<8x32xf32>
      %c0_78 = arith.constant 0 : index
      %c0_79 = arith.constant 0 : index
      %184 = vector.load %arg12[%c0_78, %c0_79] : memref<8x32xf32, #tpu.memory_space<vmem>>, vector<8x32xf32>
      tpu.vector_store %arg12[%c0_78, %c0_79], %183 {strides = array<i32>} : memref<8x32xf32, #tpu.memory_space<vmem>>, vector<8x32xf32>,
    } else {
    }
    %c0 = arith.constant 0 : index
    %c0_1 = arith.constant 0 : index
    %3 = vector.load %arg12[%c0, %c0_1] : memref<8x32xf32, #tpu.memory_space<vmem>>, vector<8x32xf32>
    %cst = arith.constant dense<0.000000e+00> : vector<8xf32>
    %4 = vector.multi_reduction <add>, %3, %cst [1] : vector<8x32xf32> to vector<8xf32>
    %5 = vector.shape_cast %4 : vector<8xf32> to vector<8x1xf32>
    %cst_2 = arith.constant 3.200000e+01 : f32
    %6 = vector.broadcast %cst_2 : f32 to vector<8x1xf32>
    %7 = arith.divf %5, %6 : vector<8x1xf32>
    %8 = vector.broadcast %7 : vector<8x1xf32> to vector<8x32xf32>
    %9 = arith.subf %3, %8 : vector<8x32xf32>
    %10 = arith.mulf %9, %9 : vector<8x32xf32>
    %cst_3 = arith.constant dense<0.000000e+00> : vector<8xf32>
    %11 = vector.multi_reduction <add>, %10, %cst_3 [1] : vector<8x32xf32> to vector<8xf32>
    %12 = vector.shape_cast %11 : vector<8xf32> to vector<8x1xf32>
    %cst_4 = arith.constant 3.200000e+01 : f32
    %13 = vector.broadcast %cst_4 : f32 to vector<8x1xf32>
    %14 = arith.divf %12, %13 : vector<8x1xf32>
    %15 = vector.broadcast %7 : vector<8x1xf32> to vector<8x32xf32>
    %16 = arith.subf %3, %15 : vector<8x32xf32>
    %cst_5 = arith.constant 9.99999974E-6 : f32
    %17 = vector.broadcast %cst_5 : f32 to vector<8x1xf32>
    %18 = arith.addf %14, %17 : vector<8x1xf32>
    %19 = math.rsqrt %18 : vector<8x1xf32>
    %20 = vector.broadcast %19 : vector<8x1xf32> to vector<8x32xf32>
    %21 = arith.mulf %16, %20 : vector<8x32xf32>
    %22 = arith.truncf %21 : vector<8x32xf32> to vector<8x32xbf16>
    %c0_6 = arith.constant 0 : index
    %c0_7 = arith.constant 0 : index
    %c0_8 = arith.constant 0 : index
    %23 = vector.load %arg3[%c0_6, %c0_7, %c0_8] : memref<1x32x96xbf16, #tpu.memory_space<vmem>>, vector<1x32x96xbf16>
    %24 = vector.shape_cast %23 : vector<1x32x96xbf16> to vector<32x96xbf16>
    %cst_9 = arith.constant dense<0.000000e+00> : vector<8x96xf32>
    %25 = tpu.matmul %22, %24, %cst_9 {dimension_numbers = #tpu.dot_dimension_numbers<[1], [0], [0], [1], [0, 0, 1, 1], [], []>} : vector<8x32xbf16>, vector<32x96xbf16>, vector<8x96xf32> -> vector<8x96xf32>
    %c0_10 = arith.constant 0 : index
    %c0_11 = arith.constant 0 : index
    %c0_12 = arith.constant 0 : index
    %26 = vector.load %arg4[%c0_10, %c0_11, %c0_12] : memref<1x1x96xf32, #tpu.memory_space<vmem>>, vector<1x1x96xf32>
    %27 = vector.shape_cast %26 : vector<1x1x96xf32> to vector<1x96xf32>
    %28 = vector.broadcast %27 : vector<1x96xf32> to vector<8x96xf32>
    %29 = arith.addf %25, %28 : vector<8x96xf32>
    %c0_13 = arith.constant 0 : index
    %c0_14 = arith.constant 0 : index
    %c0_15 = arith.constant 0 : index
    %30 = vector.load %arg6[%c0_13, %c0_14, %c0_15] : memref<1x1x32xf32, #tpu.memory_space<vmem>>, vector<1x1x32xf32>
    %31 = vector.shape_cast %30 : vector<1x1x32xf32> to vector<1x32xf32>
    %32 = vector.broadcast %31 : vector<1x32xf32> to vector<8x32xf32>
    %33 = arith.addf %3, %32 : vector<8x32xf32>
    %34 = vector.extract_strided_slice %29 {offsets = [0, 0], sizes = [8, 8], strides = [1, 1]} : vector<8x96xf32> to vector<8x8xf32>
    %35 = arith.truncf %34 : vector<8x8xf32> to vector<8x8xbf16>
    %36 = vector.extract_strided_slice %29 {offsets = [0, 32], sizes = [8, 8], strides = [1, 1]} : vector<8x96xf32> to vector<8x8xf32>
    %37 = arith.truncf %36 : vector<8x8xf32> to vector<8x8xbf16>
    %38 = vector.extract_strided_slice %29 {offsets = [0, 64], sizes = [8, 8], strides = [1, 1]} : vector<8x96xf32> to vector<8x8xf32>
    %39 = arith.truncf %38 : vector<8x8xf32> to vector<8x8xbf16>
    %cst_16 = arith.constant dense<0.000000e+00> : vector<8x8xf32>
    %40 = tpu.matmul %35, %37, %cst_16 {dimension_numbers = #tpu.dot_dimension_numbers<[1], [1], [0], [0], [0, 0, 1, 0], [], []>} : vector<8x8xbf16>, vector<8x8xbf16>, vector<8x8xf32> -> vector<8x8xf32>
    %cst_17 = arith.constant dense<0xFF800000> : vector<8xf32>
    %41 = vector.multi_reduction <maximumf>, %40, %cst_17 [1] : vector<8x8xf32> to vector<8xf32>
    %42 = vector.shape_cast %41 : vector<8xf32> to vector<8x1xf32>
    %43 = vector.broadcast %42 : vector<8x1xf32> to vector<8x8xf32>
    %44 = arith.subf %40, %43 : vector<8x8xf32>
    %45 = math.exp %44 : vector<8x8xf32>
    %cst_18 = arith.constant dense<0.000000e+00> : vector<8xf32>
    %46 = vector.multi_reduction <add>, %45, %cst_18 [1] : vector<8x8xf32> to vector<8xf32>
    %47 = vector.shape_cast %46 : vector<8xf32> to vector<8x1xf32>
    %48 = tpu.reciprocal %47 {approx = true} : vector<8x1xf32> -> vector<8x1xf32>
    %49 = arith.truncf %45 : vector<8x8xf32> to vector<8x8xbf16>
    %cst_19 = arith.constant dense<0.000000e+00> : vector<8x8xf32>
    %50 = tpu.matmul %49, %39, %cst_19 {dimension_numbers = #tpu.dot_dimension_numbers<[1], [0], [0], [1], [0, 0, 1, 1], [], []>} : vector<8x8xbf16>, vector<8x8xbf16>, vector<8x8xf32> -> vector<8x8xf32>
    %51 = vector.broadcast %48 : vector<8x1xf32> to vector<8x8xf32>
    %52 = arith.mulf %50, %51 : vector<8x8xf32>
    %53 = arith.truncf %52 : vector<8x8xf32> to vector<8x8xbf16>
    %c0_20 = arith.constant 0 : index
    %c0_21 = arith.constant 0 : index
    %c0_22 = arith.constant 0 : index
    %c0_23 = arith.constant 0 : index
    %54 = vector.load %arg5[%c0_20, %c0_21, %c0_22, %c0_23] : memref<1x4x8x32xbf16, #tpu.memory_space<vmem>>, vector<1x1x8x32xbf16>
    %55 = vector.shape_cast %54 : vector<1x1x8x32xbf16> to vector<8x32xbf16>
    %cst_24 = arith.constant dense<0.000000e+00> : vector<8x32xf32>
    %56 = tpu.matmul %53, %55, %cst_24 {dimension_numbers = #tpu.dot_dimension_numbers<[1], [0], [0], [1], [0, 0, 1, 1], [], []>} : vector<8x8xbf16>, vector<8x32xbf16>, vector<8x32xf32> -> vector<8x32xf32>
    %57 = arith.addf %33, %56 : vector<8x32xf32>
    %58 = vector.extract_strided_slice %29 {offsets = [0, 8], sizes = [8, 8], strides = [1, 1]} : vector<8x96xf32> to vector<8x8xf32>
    %59 = arith.truncf %58 : vector<8x8xf32> to vector<8x8xbf16>
    %60 = vector.extract_strided_slice %29 {offsets = [0, 40], sizes = [8, 8], strides = [1, 1]} : vector<8x96xf32> to vector<8x8xf32>
    %61 = arith.truncf %60 : vector<8x8xf32> to vector<8x8xbf16>
    %62 = vector.extract_strided_slice %29 {offsets = [0, 72], sizes = [8, 8], strides = [1, 1]} : vector<8x96xf32> to vector<8x8xf32>
    %63 = arith.truncf %62 : vector<8x8xf32> to vector<8x8xbf16>
    %cst_25 = arith.constant dense<0.000000e+00> : vector<8x8xf32>
    %64 = tpu.matmul %59, %61, %cst_25 {dimension_numbers = #tpu.dot_dimension_numbers<[1], [1], [0], [0], [0, 0, 1, 0], [], []>} : vector<8x8xbf16>, vector<8x8xbf16>, vector<8x8xf32> -> vector<8x8xf32>
    %cst_26 = arith.constant dense<0xFF800000> : vector<8xf32>
    %65 = vector.multi_reduction <maximumf>, %64, %cst_26 [1] : vector<8x8xf32> to vector<8xf32>
    %66 = vector.shape_cast %65 : vector<8xf32> to vector<8x1xf32>
    %67 = vector.broadcast %66 : vector<8x1xf32> to vector<8x8xf32>
    %68 = arith.subf %64, %67 : vector<8x8xf32>
    %69 = math.exp %68 : vector<8x8xf32>
    %cst_27 = arith.constant dense<0.000000e+00> : vector<8xf32>
    %70 = vector.multi_reduction <add>, %69, %cst_27 [1] : vector<8x8xf32> to vector<8xf32>
    %71 = vector.shape_cast %70 : vector<8xf32> to vector<8x1xf32>
    %72 = tpu.reciprocal %71 {approx = true} : vector<8x1xf32> -> vector<8x1xf32>
    %73 = arith.truncf %69 : vector<8x8xf32> to vector<8x8xbf16>
    %cst_28 = arith.constant dense<0.000000e+00> : vector<8x8xf32>
    %74 = tpu.matmul %73, %63, %cst_28 {dimension_numbers = #tpu.dot_dimension_numbers<[1], [0], [0], [1], [0, 0, 1, 1], [], []>} : vector<8x8xbf16>, vector<8x8xbf16>, vector<8x8xf32> -> vector<8x8xf32>
    %75 = vector.broadcast %72 : vector<8x1xf32> to vector<8x8xf32>
    %76 = arith.mulf %74, %75 : vector<8x8xf32>
    %77 = arith.truncf %76 : vector<8x8xf32> to vector<8x8xbf16>
    %c0_29 = arith.constant 0 : index
    %c1 = arith.constant 1 : index
    %c0_30 = arith.constant 0 : index
    %c0_31 = arith.constant 0 : index
    %78 = vector.load %arg5[%c0_29, %c1, %c0_30, %c0_31] : memref<1x4x8x32xbf16, #tpu.memory_space<vmem>>, vector<1x1x8x32xbf16>
    %79 = vector.shape_cast %78 : vector<1x1x8x32xbf16> to vector<8x32xbf16>
    %cst_32 = arith.constant dense<0.000000e+00> : vector<8x32xf32>
    %80 = tpu.matmul %77, %79, %cst_32 {dimension_numbers = #tpu.dot_dimension_numbers<[1], [0], [0], [1], [0, 0, 1, 1], [], []>} : vector<8x8xbf16>, vector<8x32xbf16>, vector<8x32xf32> -> vector<8x32xf32>
    %81 = arith.addf %57, %80 : vector<8x32xf32>
    %82 = vector.extract_strided_slice %29 {offsets = [0, 16], sizes = [8, 8], strides = [1, 1]} : vector<8x96xf32> to vector<8x8xf32>
    %83 = arith.truncf %82 : vector<8x8xf32> to vector<8x8xbf16>
    %84 = vector.extract_strided_slice %29 {offsets = [0, 48], sizes = [8, 8], strides = [1, 1]} : vector<8x96xf32> to vector<8x8xf32>
    %85 = arith.truncf %84 : vector<8x8xf32> to vector<8x8xbf16>
    %86 = vector.extract_strided_slice %29 {offsets = [0, 80], sizes = [8, 8], strides = [1, 1]} : vector<8x96xf32> to vector<8x8xf32>
    %87 = arith.truncf %86 : vector<8x8xf32> to vector<8x8xbf16>
    %cst_33 = arith.constant dense<0.000000e+00> : vector<8x8xf32>
    %88 = tpu.matmul %83, %85, %cst_33 {dimension_numbers = #tpu.dot_dimension_numbers<[1], [1], [0], [0], [0, 0, 1, 0], [], []>} : vector<8x8xbf16>, vector<8x8xbf16>, vector<8x8xf32> -> vector<8x8xf32>
    %cst_34 = arith.constant dense<0xFF800000> : vector<8xf32>
    %89 = vector.multi_reduction <maximumf>, %88, %cst_34 [1] : vector<8x8xf32> to vector<8xf32>
    %90 = vector.shape_cast %89 : vector<8xf32> to vector<8x1xf32>
    %91 = vector.broadcast %90 : vector<8x1xf32> to vector<8x8xf32>
    %92 = arith.subf %88, %91 : vector<8x8xf32>
    %93 = math.exp %92 : vector<8x8xf32>
    %cst_35 = arith.constant dense<0.000000e+00> : vector<8xf32>
    %94 = vector.multi_reduction <add>, %93, %cst_35 [1] : vector<8x8xf32> to vector<8xf32>
    %95 = vector.shape_cast %94 : vector<8xf32> to vector<8x1xf32>
    %96 = tpu.reciprocal %95 {approx = true} : vector<8x1xf32> -> vector<8x1xf32>
    %97 = arith.truncf %93 : vector<8x8xf32> to vector<8x8xbf16>
    %cst_36 = arith.constant dense<0.000000e+00> : vector<8x8xf32>
    %98 = tpu.matmul %97, %87, %cst_36 {dimension_numbers = #tpu.dot_dimension_numbers<[1], [0], [0], [1], [0, 0, 1, 1], [], []>} : vector<8x8xbf16>, vector<8x8xbf16>, vector<8x8xf32> -> vector<8x8xf32>
    %99 = vector.broadcast %96 : vector<8x1xf32> to vector<8x8xf32>
    %100 = arith.mulf %98, %99 : vector<8x8xf32>
    %101 = arith.truncf %100 : vector<8x8xf32> to vector<8x8xbf16>
    %c0_37 = arith.constant 0 : index
    %c2 = arith.constant 2 : index
    %c0_38 = arith.constant 0 : index
    %c0_39 = arith.constant 0 : index
    %102 = vector.load %arg5[%c0_37, %c2, %c0_38, %c0_39] : memref<1x4x8x32xbf16, #tpu.memory_space<vmem>>, vector<1x1x8x32xbf16>
    %103 = vector.shape_cast %102 : vector<1x1x8x32xbf16> to vector<8x32xbf16>
    %cst_40 = arith.constant dense<0.000000e+00> : vector<8x32xf32>
    %104 = tpu.matmul %101, %103, %cst_40 {dimension_numbers = #tpu.dot_dimension_numbers<[1], [0], [0], [1], [0, 0, 1, 1], [], []>} : vector<8x8xbf16>, vector<8x32xbf16>, vector<8x32xf32> -> vector<8x32xf32>
    %105 = arith.addf %81, %104 : vector<8x32xf32>
    %106 = vector.extract_strided_slice %29 {offsets = [0, 24], sizes = [8, 8], strides = [1, 1]} : vector<8x96xf32> to vector<8x8xf32>
    %107 = arith.truncf %106 : vector<8x8xf32> to vector<8x8xbf16>
    %108 = vector.extract_strided_slice %29 {offsets = [0, 56], sizes = [8, 8], strides = [1, 1]} : vector<8x96xf32> to vector<8x8xf32>
    %109 = arith.truncf %108 : vector<8x8xf32> to vector<8x8xbf16>
    %110 = vector.extract_strided_slice %29 {offsets = [0, 88], sizes = [8, 8], strides = [1, 1]} : vector<8x96xf32> to vector<8x8xf32>
    %111 = arith.truncf %110 : vector<8x8xf32> to vector<8x8xbf16>
    %cst_41 = arith.constant dense<0.000000e+00> : vector<8x8xf32>
    %112 = tpu.matmul %107, %109, %cst_41 {dimension_numbers = #tpu.dot_dimension_numbers<[1], [1], [0], [0], [0, 0, 1, 0], [], []>} : vector<8x8xbf16>, vector<8x8xbf16>, vector<8x8xf32> -> vector<8x8xf32>
    %cst_42 = arith.constant dense<0xFF800000> : vector<8xf32>
    %113 = vector.multi_reduction <maximumf>, %112, %cst_42 [1] : vector<8x8xf32> to vector<8xf32>
    %114 = vector.shape_cast %113 : vector<8xf32> to vector<8x1xf32>
    %115 = vector.broadcast %114 : vector<8x1xf32> to vector<8x8xf32>
    %116 = arith.subf %112, %115 : vector<8x8xf32>
    %117 = math.exp %116 : vector<8x8xf32>
    %cst_43 = arith.constant dense<0.000000e+00> : vector<8xf32>
    %118 = vector.multi_reduction <add>, %117, %cst_43 [1] : vector<8x8xf32> to vector<8xf32>
    %119 = vector.shape_cast %118 : vector<8xf32> to vector<8x1xf32>
    %120 = tpu.reciprocal %119 {approx = true} : vector<8x1xf32> -> vector<8x1xf32>
    %121 = arith.truncf %117 : vector<8x8xf32> to vector<8x8xbf16>
    %cst_44 = arith.constant dense<0.000000e+00> : vector<8x8xf32>
    %122 = tpu.matmul %121, %111, %cst_44 {dimension_numbers = #tpu.dot_dimension_numbers<[1], [0], [0], [1], [0, 0, 1, 1], [], []>} : vector<8x8xbf16>, vector<8x8xbf16>, vector<8x8xf32> -> vector<8x8xf32>
    %123 = vector.broadcast %120 : vector<8x1xf32> to vector<8x8xf32>
    %124 = arith.mulf %122, %123 : vector<8x8xf32>
    %125 = arith.truncf %124 : vector<8x8xf32> to vector<8x8xbf16>
    %c0_45 = arith.constant 0 : index
    %c3 = arith.constant 3 : index
    %c0_46 = arith.constant 0 : index
    %c0_47 = arith.constant 0 : index
    %126 = vector.load %arg5[%c0_45, %c3, %c0_46, %c0_47] : memref<1x4x8x32xbf16, #tpu.memory_space<vmem>>, vector<1x1x8x32xbf16>
    %127 = vector.shape_cast %126 : vector<1x1x8x32xbf16> to vector<8x32xbf16>
    %cst_48 = arith.constant dense<0.000000e+00> : vector<8x32xf32>
    %128 = tpu.matmul %125, %127, %cst_48 {dimension_numbers = #tpu.dot_dimension_numbers<[1], [0], [0], [1], [0, 0, 1, 1], [], []>} : vector<8x8xbf16>, vector<8x32xbf16>, vector<8x32xf32> -> vector<8x32xf32>
    %129 = arith.addf %105, %128 : vector<8x32xf32>
    %cst_49 = arith.constant dense<0.000000e+00> : vector<8xf32>
    %130 = vector.multi_reduction <add>, %129, %cst_49 [1] : vector<8x32xf32> to vector<8xf32>
    %131 = vector.shape_cast %130 : vector<8xf32> to vector<8x1xf32>
    %cst_50 = arith.constant 3.200000e+01 : f32
    %132 = vector.broadcast %cst_50 : f32 to vector<8x1xf32>
    %133 = arith.divf %131, %132 : vector<8x1xf32>
    %134 = vector.broadcast %133 : vector<8x1xf32> to vector<8x32xf32>
    %135 = arith.subf %129, %134 : vector<8x32xf32>
    %136 = arith.mulf %135, %135 : vector<8x32xf32>
    %cst_51 = arith.constant dense<0.000000e+00> : vector<8xf32>
    %137 = vector.multi_reduction <add>, %136, %cst_51 [1] : vector<8x32xf32> to vector<8xf32>
    %138 = vector.shape_cast %137 : vector<8xf32> to vector<8x1xf32>
    %cst_52 = arith.constant 3.200000e+01 : f32
    %139 = vector.broadcast %cst_52 : f32 to vector<8x1xf32>
    %140 = arith.divf %138, %139 : vector<8x1xf32>
    %141 = vector.broadcast %133 : vector<8x1xf32> to vector<8x32xf32>
    %142 = arith.subf %129, %141 : vector<8x32xf32>
    %cst_53 = arith.constant 9.99999974E-6 : f32
    %143 = vector.broadcast %cst_53 : f32 to vector<8x1xf32>
    %144 = arith.addf %140, %143 : vector<8x1xf32>
    %145 = math.rsqrt %144 : vector<8x1xf32>
    %146 = vector.broadcast %145 : vector<8x1xf32> to vector<8x32xf32>
    %147 = arith.mulf %142, %146 : vector<8x32xf32>
    %148 = arith.truncf %147 : vector<8x32xf32> to vector<8x32xbf16>
    %c0_54 = arith.constant 0 : index
    %c0_55 = arith.constant 0 : index
    %c0_56 = arith.constant 0 : index
    %149 = vector.load %arg7[%c0_54, %c0_55, %c0_56] : memref<1x32x64xbf16, #tpu.memory_space<vmem>>, vector<1x32x64xbf16>
    %150 = vector.shape_cast %149 : vector<1x32x64xbf16> to vector<32x64xbf16>
    %cst_57 = arith.constant dense<0.000000e+00> : vector<8x64xf32>
    %151 = tpu.matmul %148, %150, %cst_57 {dimension_numbers = #tpu.dot_dimension_numbers<[1], [0], [0], [1], [0, 0, 1, 1], [], []>} : vector<8x32xbf16>, vector<32x64xbf16>, vector<8x64xf32> -> vector<8x64xf32>
    %c0_58 = arith.constant 0 : index
    %c0_59 = arith.constant 0 : index
    %c0_60 = arith.constant 0 : index
    %152 = vector.load %arg8[%c0_58, %c0_59, %c0_60] : memref<1x1x64xf32, #tpu.memory_space<vmem>>, vector<1x1x64xf32>
    %153 = vector.shape_cast %152 : vector<1x1x64xf32> to vector<1x64xf32>
    %154 = vector.broadcast %153 : vector<1x64xf32> to vector<8x64xf32>
    %155 = arith.addf %151, %154 : vector<8x64xf32>
    %156 = arith.mulf %155, %155 : vector<8x64xf32>
    %157 = arith.mulf %156, %155 : vector<8x64xf32>
    %cst_61 = arith.constant 5.000000e-01 : f32
    %158 = vector.broadcast %cst_61 : f32 to vector<8x64xf32>
    %159 = arith.mulf %158, %155 : vector<8x64xf32>
    %cst_62 = arith.constant 4.471500e-02 : f32
    %160 = vector.broadcast %cst_62 : f32 to vector<8x64xf32>
    %161 = arith.mulf %160, %157 : vector<8x64xf32>
    %162 = arith.addf %155, %161 : vector<8x64xf32>
    %cst_63 = arith.constant 0.797884583 : f32
    %163 = vector.broadcast %cst_63 : f32 to vector<8x64xf32>
    %164 = arith.mulf %163, %162 : vector<8x64xf32>
    %165 = math.tanh %164 : vector<8x64xf32>
    %cst_64 = arith.constant 1.000000e+00 : f32
    %166 = vector.broadcast %cst_64 : f32 to vector<8x64xf32>
    %167 = arith.addf %166, %165 : vector<8x64xf32>
    %168 = arith.mulf %159, %167 : vector<8x64xf32>
    %169 = arith.truncf %168 : vector<8x64xf32> to vector<8x64xbf16>
    %c0_65 = arith.constant 0 : index
    %c0_66 = arith.constant 0 : index
    %c0_67 = arith.constant 0 : index
    %170 = vector.load %arg9[%c0_65, %c0_66, %c0_67] : memref<1x64x32xbf16, #tpu.memory_space<vmem>>, vector<1x64x32xbf16>
    %171 = vector.shape_cast %170 : vector<1x64x32xbf16> to vector<64x32xbf16>
    %cst_68 = arith.constant dense<0.000000e+00> : vector<8x32xf32>
    %172 = tpu.matmul %169, %171, %cst_68 {dimension_numbers = #tpu.dot_dimension_numbers<[1], [0], [0], [1], [0, 0, 1, 1], [], []>} : vector<8x64xbf16>, vector<64x32xbf16>, vector<8x32xf32> -> vector<8x32xf32>
    %c0_69 = arith.constant 0 : index
    %c0_70 = arith.constant 0 : index
    %c0_71 = arith.constant 0 : index
    %173 = vector.load %arg10[%c0_69, %c0_70, %c0_71] : memref<1x1x32xf32, #tpu.memory_space<vmem>>, vector<1x1x32xf32>
    %174 = vector.shape_cast %173 : vector<1x1x32xf32> to vector<1x32xf32>
    %175 = vector.broadcast %174 : vector<1x32xf32> to vector<8x32xf32>
    %176 = arith.addf %172, %175 : vector<8x32xf32>
    %177 = arith.addf %129, %176 : vector<8x32xf32>
    %c0_72 = arith.constant 0 : index
    %c0_73 = arith.constant 0 : index
    %178 = vector.load %arg12[%c0_72, %c0_73] : memref<8x32xf32, #tpu.memory_space<vmem>>, vector<8x32xf32>
    tpu.vector_store %arg12[%c0_72, %c0_73], %177 {strides = array<i32>} : memref<8x32xf32, #tpu.memory_space<vmem>>, vector<8x32xf32>,
    %c1_i32 = arith.constant 1 : i32
    %179 = arith.cmpi eq, %arg1, %c1_i32 : i32
    %180 = arith.extui %179 : i1 to i32
    %c0_i32_74 = arith.constant 0 : i32
    %181 = arith.cmpi ne, %180, %c0_i32_74 : i32
    scf.if %181 {
      %c0_75 = arith.constant 0 : index
      %c0_76 = arith.constant 0 : index
      %c0_77 = arith.constant 0 : index
      %182 = vector.load %arg11[%c0_75, %c0_76, %c0_77] : memref<1x8x32xf32, #tpu.memory_space<vmem>>, vector<1x8x32xf32>
      %183 = vector.shape_cast %182 : vector<1x8x32xf32> to vector<8x32xf32>
      %184 = vector.shape_cast %177 : vector<8x32xf32> to vector<1x8x32xf32>
      tpu.vector_store %arg11[%c0_75, %c0_76, %c0_77], %184 {strides = array<i32>} : memref<1x8x32xf32, #tpu.memory_space<vmem>>, vector<1x8x32xf32>,
    } else {
    }
    return
  }
  func.func @transform_0(%arg0: i32, %arg1: i32) -> (i32, i32, i32) {
    %c0_i32 = arith.constant 0 : i32
    %c0_i32_0 = arith.constant 0 : i32
    %c0_i32_1 = arith.constant 0 : i32
    return %arg0, %c0_i32, %c0_i32_0 : i32, i32, i32
  }
  func.func @transform_1(%arg0: i32, %arg1: i32) -> (i32, i32, i32) {
    %c0_i32 = arith.constant 0 : i32
    %c0_i32_0 = arith.constant 0 : i32
    %c0_i32_1 = arith.constant 0 : i32
    return %arg1, %c0_i32, %c0_i32_0 : i32, i32, i32
  }
  func.func @transform_2(%arg0: i32, %arg1: i32) -> (i32, i32, i32) {
    %c0_i32 = arith.constant 0 : i32
    %c0_i32_0 = arith.constant 0 : i32
    %c0_i32_1 = arith.constant 0 : i32
    return %arg1, %c0_i32, %c0_i32_0 : i32, i32, i32
  }
  func.func @transform_3(%arg0: i32, %arg1: i32) -> (i32, i32, i32, i32) {
    %c0_i32 = arith.constant 0 : i32
    %c0_i32_0 = arith.constant 0 : i32
    %c0_i32_1 = arith.constant 0 : i32
    %c0_i32_2 = arith.constant 0 : i32
    return %arg1, %c0_i32, %c0_i32_0, %c0_i32_1 : i32, i32, i32, i32
  }
  func.func @transform_4(%arg0: i32, %arg1: i32) -> (i32, i32, i32) {
    %c0_i32 = arith.constant 0 : i32
    %c0_i32_0 = arith.constant 0 : i32
    %c0_i32_1 = arith.constant 0 : i32
    return %arg1, %c0_i32, %c0_i32_0 : i32, i32, i32
  }
  func.func @transform_5(%arg0: i32, %arg1: i32) -> (i32, i32, i32) {
    %c0_i32 = arith.constant 0 : i32
    %c0_i32_0 = arith.constant 0 : i32
    %c0_i32_1 = arith.constant 0 : i32
    return %arg1, %c0_i32, %c0_i32_0 : i32, i32, i32
  }
  func.func @transform_6(%arg0: i32, %arg1: i32) -> (i32, i32, i32) {
    %c0_i32 = arith.constant 0 : i32
    %c0_i32_0 = arith.constant 0 : i32
    %c0_i32_1 = arith.constant 0 : i32
    return %arg1, %c0_i32, %c0_i32_0 : i32, i32, i32
  }
  func.func @transform_7(%arg0: i32, %arg1: i32) -> (i32, i32, i32) {
    %c0_i32 = arith.constant 0 : i32
    %c0_i32_0 = arith.constant 0 : i32
    %c0_i32_1 = arith.constant 0 : i32
    return %arg1, %c0_i32, %c0_i32_0 : i32, i32, i32
  }
  func.func @transform_8(%arg0: i32, %arg1: i32) -> (i32, i32, i32) {
    %c0_i32 = arith.constant 0 : i32
    %c0_i32_0 = arith.constant 0 : i32
    %c0_i32_1 = arith.constant 0 : i32
    return %arg1, %c0_i32, %c0_i32_0 : i32, i32, i32
  }
  func.func @transform_9(%arg0: i32, %arg1: i32) -> (i32, i32, i32) {
    %c0_i32 = arith.constant 0 : i32
    %c0_i32_0 = arith.constant 0 : i32
    %c0_i32_1 = arith.constant 0 : i32
    return %arg0, %c0_i32, %c0_i32_0 : i32, i32, i32
  }
}

</mosaic_0001>

<llo_original>
// kernel: tpu_custom_call.1
$region0: #{tpu_custom_call.1}
  #allocation0 [shape = 'u32[]', space=smem, size = 0x4, offset = 0x4, fixed_abs, tag = 'smem constant byte address 0x4 - core index']
  #allocation1 [shape = 'u32[144,128]{1,0:T(1,128)}', space=vmem, size = 0x12000, scoped, tag = 'internal scratch']
  #allocation2 [shape = 'f32[8,32]{1,0:T(8,128)}', space=vmem, size = 0x1000, scoped, tag = 'scratch operand']
  %s0 = inlined_call_operand.hbm [shape: f32[2,8,32], index: 0, kind: input, shape index: {}]
  %s1 = inlined_call_operand.vmem [shape: bf16[2,32,96], index: 1, kind: input, shape index: {}]
  %s2 = inlined_call_operand.vmem [shape: f32[2,1,96], index: 2, kind: input, shape index: {}]
  %s3 = inlined_call_operand.vmem [shape: bf16[2,4,8,32], index: 3, kind: input, shape index: {}]
  %s4 = inlined_call_operand.vmem [shape: f32[2,1,32], index: 4, kind: input, shape index: {}]
  %s5 = inlined_call_operand.vmem [shape: bf16[2,32,64], index: 5, kind: input, shape index: {}]
  %s6 = inlined_call_operand.vmem [shape: f32[2,1,64], index: 6, kind: input, shape index: {}]
  %s7 = inlined_call_operand.vmem [shape: bf16[2,64,32], index: 7, kind: input, shape index: {}]
  %s8 = inlined_call_operand.vmem [shape: f32[2,1,32], index: 8, kind: input, shape index: {}]
  %s9 = inlined_call_operand.hbm [shape: f32[2,8,32], index: 9, kind: output, shape index: {}]
  %s10 = sld [smem:[#allocation0]]
  $region81: #{tpu_custom_call.1} parent=0
    _
  %s12 = ssub.s32 1, %s10
  %s13 = scalar_select 0, %s12, %s10
  $region1: #{tpu_custom_call.1} parent=0
    #allocation3 [shape = 'u8[8192]{0}', space=vmem, size = 0x2000, scoped, tag = 'input window, operand 0']
    #allocation4 [shape = 's32[2]{0}', space=sflag, size = 0x8, scoped, tag = 'scoped memory for tpu_custom_call.1']
    #allocation5 [shape = 's32[2]{0}', space=sflag, size = 0x8, scoped, tag = 'scoped memory for tpu_custom_call.1']
    #allocation6 [shape = 'u8[8192]{0}', space=vmem, size = 0x2000, scoped, tag = 'output window, operand 0']
    %14 = vsyncpa [#allocation4], 0
    %s15 = scalar_lea.sflag [#allocation4], 1
    %16 = vsyncpa %s15, 0
    %17 = vsyncpa [#allocation5], 0
    %s18 = scalar_lea.sflag [#allocation5], 1
    %19 = vsyncpa %s18, 0
    loop: start=0, step=1, limit=6
    $region2: #{tpu_custom_call.1} parent=1 // loop_pre_header
      _
    $region3: #{tpu_custom_call.1} parent=1 // loop_header
      %s21 = sphi 0, %s25
      %p22 = scmp.ge.s32.totalorder %s21, 6
      %s28 = sphi 0, %s40
      %s29 = sphi 0, %s36
      %s30 = sphi 0, %s28
      %s31 = sphi 0, %s29
      %s32 = sphi 0, %s30
      %s33 = sphi 0, %s31
      %s43 = sphi 0, %s45
      %s46 = sphi 0, %s43
      %s47 = sphi 0, %s46
      %s63 = sphi 0, %s47
      %s69 = sphi 0, %s71
      %s72 = sphi 0, %s69
      %s73 = sphi 0, %s72
      %s89 = sphi 0, %s73
      %s95 = sphi 0, %s97
      %s98 = sphi 0, %s95
      %s99 = sphi 0, %s98
      %s115 = sphi 0, %s99
      %s121 = sphi 0, %s123
      %s124 = sphi 0, %s121
      %s125 = sphi 0, %s124
      %s141 = sphi 0, %s125
      %s147 = sphi 0, %s149
      %s150 = sphi 0, %s147
      %s151 = sphi 0, %s150
      %s167 = sphi 0, %s151
      %s173 = sphi 0, %s175
      %s176 = sphi 0, %s173
      %s177 = sphi 0, %s176
      %s193 = sphi 0, %s177
      %s199 = sphi 0, %s201
      %s202 = sphi 0, %s199
      %s203 = sphi 0, %s202
      %s219 = sphi 0, %s203
      %s225 = sphi 0, %s227
      %s228 = sphi 0, %s225
      %s229 = sphi 0, %s228
      %s245 = sphi 0, %s229
      %s251 = sphi 0, %s253
      %s254 = sphi 0, %s251
      %s255 = sphi 0, %s254
      %s271 = sphi 0, %s255
      %s277 = sphi 0, %s279
      %s280 = sphi 0, %s277
      %s281 = sphi 0, %s280
      %s297 = sphi 0, %s281
    $region4: #{tpu_custom_call.1} parent=1 // loop_header_branch
      %24 = sbr.rel (%p22) target = $region8
    $region5: #{tpu_custom_call.1} parent=1 // loop_body
      %s26 = ssub.s32 %s21, 1
      %s27 = ssub.s32 %s21, 2
      %s34 = sadd.s32 1, %s29
      %p35 = scmp.ge.s32.totalorder %s34, 2
      %s36 = scalar_select %p35, 0, %s34
      %s37 = sadd.s32 1, %s28
      %s38 = scalar_select %p35, %s37, %s28
      %p39 = scmp.ge.s32.totalorder %s38, 2
      %s40 = scalar_select %p39, 0, %s38
      %s41 = ssub.s32 %s28, %s40
      %p42 = scmp.eq.s32.totalorder %s41, 0
      %s44 = sadd.s32 %s43, 1
      %s45 = scalar_select %p42, %s43, %s44
      %p48 = pneg %p42
      %p49 = scmp.eq.s32.totalorder %s21, 3
      %p50 = por %p48, %p49
      %p51 = scmp.ne.s32.totalorder %s43, %s46
      %p52 = scmp.eq.s32.totalorder %s21, 0
      %p53 = por %p51, %p52
      %p54 = scmp.ne.s32.totalorder %s43, %s46
      %p55 = scmp.eq.s32.totalorder %s26, 3
      %p56 = por %p54, %p55
      %p57 = scmp.ne.s32.totalorder %s46, %s47
      %p58 = scmp.eq.s32.totalorder %s26, 0
      %p59 = por %p57, %p58
      %p60 = scmp.ne.s32.totalorder %s46, %s47
      %p61 = scmp.eq.s32.totalorder %s27, 3
      %p62 = por %p60, %p61
      %p64 = scmp.ne.s32.totalorder %s47, %s63
      %p65 = scmp.eq.s32.totalorder %s27, 0
      %p66 = por %p64, %p65
      %s67 = ssub.s32 %s29, %s36
      %p68 = scmp.eq.s32.totalorder %s67, 0
      %s70 = sadd.s32 %s69, 1
      %s71 = scalar_select %p68, %s69, %s70
      %p74 = pneg %p68
      %p75 = scmp.eq.s32.totalorder %s21, 3
      %p76 = por %p74, %p75
      %p77 = scmp.ne.s32.totalorder %s69, %s72
      %p78 = scmp.eq.s32.totalorder %s21, 0
      %p79 = por %p77, %p78
      %p80 = scmp.ne.s32.totalorder %s69, %s72
      %p81 = scmp.eq.s32.totalorder %s26, 3
      %p82 = por %p80, %p81
      %p83 = scmp.ne.s32.totalorder %s72, %s73
      %p84 = scmp.eq.s32.totalorder %s26, 0
      %p85 = por %p83, %p84
      %p86 = scmp.ne.s32.totalorder %s72, %s73
      %p87 = scmp.eq.s32.totalorder %s27, 3
      %p88 = por %p86, %p87
      %p90 = scmp.ne.s32.totalorder %s73, %s89
      %p91 = scmp.eq.s32.totalorder %s27, 0
      %p92 = por %p90, %p91
      %s93 = ssub.s32 %s29, %s36
      %p94 = scmp.eq.s32.totalorder %s93, 0
      %s96 = sadd.s32 %s95, 1
      %s97 = scalar_select %p94, %s95, %s96
      %p100 = pneg %p94
      %p101 = scmp.eq.s32.totalorder %s21, 3
      %p102 = por %p100, %p101
      %p103 = scmp.ne.s32.totalorder %s95, %s98
      %p104 = scmp.eq.s32.totalorder %s21, 0
      %p105 = por %p103, %p104
      %p106 = scmp.ne.s32.totalorder %s95, %s98
      %p107 = scmp.eq.s32.totalorder %s26, 3
      %p108 = por %p106, %p107
      %p109 = scmp.ne.s32.totalorder %s98, %s99
      %p110 = scmp.eq.s32.totalorder %s26, 0
      %p111 = por %p109, %p110
      %p112 = scmp.ne.s32.totalorder %s98, %s99
      %p113 = scmp.eq.s32.totalorder %s27, 3
      %p114 = por %p112, %p113
      %p116 = scmp.ne.s32.totalorder %s99, %s115
      %p117 = scmp.eq.s32.totalorder %s27, 0
      %p118 = por %p116, %p117
      %s119 = ssub.s32 %s29, %s36
      %p120 = scmp.eq.s32.totalorder %s119, 0
      %s122 = sadd.s32 %s121, 1
      %s123 = scalar_select %p120, %s121, %s122
      %p126 = pneg %p120
      %p127 = scmp.eq.s32.totalorder %s21, 3
      %p128 = por %p126, %p127
      %p129 = scmp.ne.s32.totalorder %s121, %s124
      %p130 = scmp.eq.s32.totalorder %s21, 0
      %p131 = por %p129, %p130
      %p132 = scmp.ne.s32.totalorder %s121, %s124
      %p133 = scmp.eq.s32.totalorder %s26, 3
      %p134 = por %p132, %p133
      %p135 = scmp.ne.s32.totalorder %s124, %s125
      %p136 = scmp.eq.s32.totalorder %s26, 0
      %p137 = por %p135, %p136
      %p138 = scmp.ne.s32.totalorder %s124, %s125
      %p139 = scmp.eq.s32.totalorder %s27, 3
      %p140 = por %p138, %p139
      %p142 = scmp.ne.s32.totalorder %s125, %s141
      %p143 = scmp.eq.s32.totalorder %s27, 0
      %p144 = por %p142, %p143
      %s145 = ssub.s32 %s29, %s36
      %p146 = scmp.eq.s32.totalorder %s145, 0
      %s148 = sadd.s32 %s147, 1
      %s149 = scalar_select %p146, %s147, %s148
      %p152 = pneg %p146
      %p153 = scmp.eq.s32.totalorder %s21, 3
      %p154 = por %p152, %p153
      %p155 = scmp.ne.s32.totalorder %s147, %s150
      %p156 = scmp.eq.s32.totalorder %s21, 0
      %p157 = por %p155, %p156
      %p158 = scmp.ne.s32.totalorder %s147, %s150
      %p159 = scmp.eq.s32.totalorder %s26, 3
      %p160 = por %p158, %p159
      %p161 = scmp.ne.s32.totalorder %s150, %s151
      %p162 = scmp.eq.s32.totalorder %s26, 0
      %p163 = por %p161, %p162
      %p164 = scmp.ne.s32.totalorder %s150, %s151
      %p165 = scmp.eq.s32.totalorder %s27, 3
      %p166 = por %p164, %p165
      %p168 = scmp.ne.s32.totalorder %s151, %s167
      %p169 = scmp.eq.s32.totalorder %s27, 0
      %p170 = por %p168, %p169
      %s171 = ssub.s32 %s29, %s36
      %p172 = scmp.eq.s32.totalorder %s171, 0
      %s174 = sadd.s32 %s173, 1
      %s175 = scalar_select %p172, %s173, %s174
      %p178 = pneg %p172
      %p179 = scmp.eq.s32.totalorder %s21, 3
      %p180 = por %p178, %p179
      %p181 = scmp.ne.s32.totalorder %s173, %s176
      %p182 = scmp.eq.s32.totalorder %s21, 0
      %p183 = por %p181, %p182
      %p184 = scmp.ne.s32.totalorder %s173, %s176
      %p185 = scmp.eq.s32.totalorder %s26, 3
      %p186 = por %p184, %p185
      %p187 = scmp.ne.s32.totalorder %s176, %s177
      %p188 = scmp.eq.s32.totalorder %s26, 0
      %p189 = por %p187, %p188
      %p190 = scmp.ne.s32.totalorder %s176, %s177
      %p191 = scmp.eq.s32.totalorder %s27, 3
      %p192 = por %p190, %p191
      %p194 = scmp.ne.s32.totalorder %s177, %s193
      %p195 = scmp.eq.s32.totalorder %s27, 0
      %p196 = por %p194, %p195
      %s197 = ssub.s32 %s29, %s36
      %p198 = scmp.eq.s32.totalorder %s197, 0
      %s200 = sadd.s32 %s199, 1
      %s201 = scalar_select %p198, %s199, %s200
      %p204 = pneg %p198
      %p205 = scmp.eq.s32.totalorder %s21, 3
      %p206 = por %p204, %p205
      %p207 = scmp.ne.s32.totalorder %s199, %s202
      %p208 = scmp.eq.s32.totalorder %s21, 0
      %p209 = por %p207, %p208
      %p210 = scmp.ne.s32.totalorder %s199, %s202
      %p211 = scmp.eq.s32.totalorder %s26, 3
      %p212 = por %p210, %p211
      %p213 = scmp.ne.s32.totalorder %s202, %s203
      %p214 = scmp.eq.s32.totalorder %s26, 0
      %p215 = por %p213, %p214
      %p216 = scmp.ne.s32.totalorder %s202, %s203
      %p217 = scmp.eq.s32.totalorder %s27, 3
      %p218 = por %p216, %p217
      %p220 = scmp.ne.s32.totalorder %s203, %s219
      %p221 = scmp.eq.s32.totalorder %s27, 0
      %p222 = por %p220, %p221
      %s223 = ssub.s32 %s29, %s36
      %p224 = scmp.eq.s32.totalorder %s223, 0
      %s226 = sadd.s32 %s225, 1
      %s227 = scalar_select %p224, %s225, %s226
      %p230 = pneg %p224
      %p231 = scmp.eq.s32.totalorder %s21, 3
      %p232 = por %p230, %p231
      %p233 = scmp.ne.s32.totalorder %s225, %s228
      %p234 = scmp.eq.s32.totalorder %s21, 0
      %p235 = por %p233, %p234
      %p236 = scmp.ne.s32.totalorder %s225, %s228
      %p237 = scmp.eq.s32.totalorder %s26, 3
      %p238 = por %p236, %p237
      %p239 = scmp.ne.s32.totalorder %s228, %s229
      %p240 = scmp.eq.s32.totalorder %s26, 0
      %p241 = por %p239, %p240
      %p242 = scmp.ne.s32.totalorder %s228, %s229
      %p243 = scmp.eq.s32.totalorder %s27, 3
      %p244 = por %p242, %p243
      %p246 = scmp.ne.s32.totalorder %s229, %s245
      %p247 = scmp.eq.s32.totalorder %s27, 0
      %p248 = por %p246, %p247
      %s249 = ssub.s32 %s29, %s36
      %p250 = scmp.eq.s32.totalorder %s249, 0
      %s252 = sadd.s32 %s251, 1
      %s253 = scalar_select %p250, %s251, %s252
      %p256 = pneg %p250
      %p257 = scmp.eq.s32.totalorder %s21, 3
      %p258 = por %p256, %p257
      %p259 = scmp.ne.s32.totalorder %s251, %s254
      %p260 = scmp.eq.s32.totalorder %s21, 0
      %p261 = por %p259, %p260
      %p262 = scmp.ne.s32.totalorder %s251, %s254
      %p263 = scmp.eq.s32.totalorder %s26, 3
      %p264 = por %p262, %p263
      %p265 = scmp.ne.s32.totalorder %s254, %s255
      %p266 = scmp.eq.s32.totalorder %s26, 0
      %p267 = por %p265, %p266
      %p268 = scmp.ne.s32.totalorder %s254, %s255
      %p269 = scmp.eq.s32.totalorder %s27, 3
      %p270 = por %p268, %p269
      %p272 = scmp.ne.s32.totalorder %s255, %s271
      %p273 = scmp.eq.s32.totalorder %s27, 0
      %p274 = por %p272, %p273
      %s275 = ssub.s32 %s28, %s40
      %p276 = scmp.eq.s32.totalorder %s275, 0
      %s278 = sadd.s32 %s277, 1
      %s279 = scalar_select %p276, %s277, %s278
      %p282 = pneg %p276
      %p283 = scmp.eq.s32.totalorder %s21, 3
      %p284 = por %p282, %p283
      %p285 = scmp.ne.s32.totalorder %s277, %s280
      %p286 = scmp.eq.s32.totalorder %s21, 0
      %p287 = por %p285, %p286
      %p288 = scmp.ne.s32.totalorder %s277, %s280
      %p289 = scmp.eq.s32.totalorder %s26, 3
      %p290 = por %p288, %p289
      %p291 = scmp.ne.s32.totalorder %s280, %s281
      %p292 = scmp.eq.s32.totalorder %s26, 0
      %p293 = por %p291, %p292
      %p294 = scmp.ne.s32.totalorder %s280, %s281
      %p295 = scmp.eq.s32.totalorder %s27, 3
      %p296 = por %p294, %p295
      %p298 = scmp.ne.s32.totalorder %s281, %s297
      %p299 = scmp.eq.s32.totalorder %s27, 0
      %p300 = por %p298, %p299
      %p301 = scmp.le.s32.totalorder 1, %s21
      %p302 = scmp.lt.s32.totalorder %s21, 5
      %p303 = pnand %p301, %p302
      %p304 = pneg %p303
      // Predicated region
      $region9: #{tpu_custom_call.1} parent=5 // pred_check
        _
      $region10: #{tpu_custom_call.1} parent=5 // pred_check_branch
        %306 = sbr.rel (%p303) target = $region12
      $region11: #{tpu_custom_call.1} parent=5 // pred_region
        %s307 = ssub.s32 %s21, 1
      $region12: #{tpu_custom_call.1} parent=5 // pred_fallthru
        _
      %p308 = scmp.lt.s32.totalorder %s21, 4
      // Predicated region
      $region13: #{tpu_custom_call.1} parent=5 // pred_check
        %p309 = pneg %p308
      $region14: #{tpu_custom_call.1} parent=5 // pred_check_branch
        %311 = sbr.rel (%p309) target = $region16
      $region15: #{tpu_custom_call.1} parent=5 // pred_region
        // Predicated region
        $region17: #{tpu_custom_call.1} parent=15 // pred_check
          %p312 = pneg %p53
        $region18: #{tpu_custom_call.1} parent=15 // pred_check_branch
          %314 = sbr.rel (%p312) target = $region20
        $region19: #{tpu_custom_call.1} parent=15 // pred_region
          %s315 = sand.u32 %s43, 1
          %s316 = scalar_lea.sflag [#allocation4], %s315
          %s317 = sand.u32 %s43, 1
          %s318 = smul.addr %s317, 8
          %s319 = scalar_lea.vmem [#allocation3], %s318
          %s321 = ssub.s32 128, 128
          %322 = vsyncadd %s316, %s321
          %s323 = smul.addr %s28, 128
          %s324 = scalar_lea.hbm %s0, %s323
          %s326 = sshll.u32 %s319, 4
          %s327 = int_to_ptr.vmem [resolvable:$true] %s326
          %329 = dma.hbm_to_vmem [thread:$0]  %s324, 128, %s327, %s316
        $region20: #{tpu_custom_call.1} parent=15 // pred_fallthru
          _
        // Predicated region
        $region21: #{tpu_custom_call.1} parent=15 // pred_check
          %p330 = pneg %p79
        $region22: #{tpu_custom_call.1} parent=15 // pred_check_branch
          %332 = sbr.rel (%p330) target = $region24
        $region23: #{tpu_custom_call.1} parent=15 // pred_region
          %p333 = scmp.lt.s32.totalorder %s29, 1
          %s334 = scalar_select %p333, %s29, 1
          %s335 = smul.addr %s334, 4
          %s336 = smul.addr %s335, 4
          %s337 = scalar_lea.vmem %s1, %s336
        $region24: #{tpu_custom_call.1} parent=15 // pred_fallthru
          _
        // Predicated region
        $region25: #{tpu_custom_call.1} parent=15 // pred_check
          %p338 = pneg %p105
        $region26: #{tpu_custom_call.1} parent=15 // pred_check_branch
          %340 = sbr.rel (%p338) target = $region28
        $region27: #{tpu_custom_call.1} parent=15 // pred_region
          %p341 = scmp.lt.s32.totalorder %s29, 1
          %s342 = scalar_select %p341, %s29, 1
          %s343 = scalar_lea.vmem %s2, %s342
        $region28: #{tpu_custom_call.1} parent=15 // pred_fallthru
          _
        // Predicated region
        $region29: #{tpu_custom_call.1} parent=15 // pred_check
          %p344 = pneg %p131
        $region30: #{tpu_custom_call.1} parent=15 // pred_check_branch
          %346 = sbr.rel (%p344) target = $region32
        $region31: #{tpu_custom_call.1} parent=15 // pred_region
          %p347 = scmp.lt.s32.totalorder %s29, 1
          %s348 = scalar_select %p347, %s29, 1
          %s349 = smul.addr %s348, 4
          %s350 = smul.addr %s349, 4
          %s351 = scalar_lea.vmem %s3, %s350
        $region32: #{tpu_custom_call.1} parent=15 // pred_fallthru
          _
        // Predicated region
        $region33: #{tpu_custom_call.1} parent=15 // pred_check
          %p352 = pneg %p157
        $region34: #{tpu_custom_call.1} parent=15 // pred_check_branch
          %354 = sbr.rel (%p352) target = $region36
        $region35: #{tpu_custom_call.1} parent=15 // pred_region
          %p355 = scmp.lt.s32.totalorder %s29, 1
          %s356 = scalar_select %p355, %s29, 1
          %s357 = scalar_lea.vmem %s4, %s356
        $region36: #{tpu_custom_call.1} parent=15 // pred_fallthru
          _
        // Predicated region
        $region37: #{tpu_custom_call.1} parent=15 // pred_check
          %p358 = pneg %p183
        $region38: #{tpu_custom_call.1} parent=15 // pred_check_branch
          %360 = sbr.rel (%p358) target = $region40
        $region39: #{tpu_custom_call.1} parent=15 // pred_region
          %p361 = scmp.lt.s32.totalorder %s29, 1
          %s362 = scalar_select %p361, %s29, 1
          %s363 = smul.addr %s362, 4
          %s364 = smul.addr %s363, 4
          %s365 = scalar_lea.vmem %s5, %s364
        $region40: #{tpu_custom_call.1} parent=15 // pred_fallthru
          _
        // Predicated region
        $region41: #{tpu_custom_call.1} parent=15 // pred_check
          %p366 = pneg %p209
        $region42: #{tpu_custom_call.1} parent=15 // pred_check_branch
          %368 = sbr.rel (%p366) target = $region44
        $region43: #{tpu_custom_call.1} parent=15 // pred_region
          %p369 = scmp.lt.s32.totalorder %s29, 1
          %s370 = scalar_select %p369, %s29, 1
          %s371 = scalar_lea.vmem %s6, %s370
        $region44: #{tpu_custom_call.1} parent=15 // pred_fallthru
          _
        // Predicated region
        $region45: #{tpu_custom_call.1} parent=15 // pred_check
          %p372 = pneg %p235
        $region46: #{tpu_custom_call.1} parent=15 // pred_check_branch
          %374 = sbr.rel (%p372) target = $region48
        $region47: #{tpu_custom_call.1} parent=15 // pred_region
          %p375 = scmp.lt.s32.totalorder %s29, 1
          %s376 = scalar_select %p375, %s29, 1
          %s377 = smul.addr %s376, 8
          %s378 = smul.addr %s377, 4
          %s379 = scalar_lea.vmem %s7, %s378
        $region48: #{tpu_custom_call.1} parent=15 // pred_fallthru
          _
        // Predicated region
        $region49: #{tpu_custom_call.1} parent=15 // pred_check
          %p380 = pneg %p261
        $region50: #{tpu_custom_call.1} parent=15 // pred_check_branch
          %382 = sbr.rel (%p380) target = $region52
        $region51: #{tpu_custom_call.1} parent=15 // pred_region
          %p383 = scmp.lt.s32.totalorder %s29, 1
          %s384 = scalar_select %p383, %s29, 1
          %s385 = scalar_lea.vmem %s8, %s384
        $region52: #{tpu_custom_call.1} parent=15 // pred_fallthru
          _
      $region16: #{tpu_custom_call.1} parent=5 // pred_fallthru
        _
      %p386 = scmp.le.s32.totalorder 1, %s21
      %p387 = scmp.lt.s32.totalorder %s21, 5
      %p388 = pnand %p386, %p387
      %p389 = pneg %p388
      // Predicated region
      $region53: #{tpu_custom_call.1} parent=5 // pred_check
        _
      $region54: #{tpu_custom_call.1} parent=5 // pred_check_branch
        %391 = sbr.rel (%p388) target = $region56
      $region55: #{tpu_custom_call.1} parent=5 // pred_region
        %s392 = ssub.s32 %s21, 1
        %s393 = sand.u32 %s46, 1
        %s394 = scalar_lea.sflag [#allocation4], %s393
        %s395 = sand.u32 %s46, 1
        %s396 = smul.addr %s395, 8
        %s397 = scalar_lea.vmem [#allocation3], %s396
        // Predicated region
        $region57: #{tpu_custom_call.1} parent=55 // pred_check
          %p398 = pneg %p59
        $region58: #{tpu_custom_call.1} parent=55 // pred_check_branch
          %400 = sbr.rel (%p398) target = $region60
        $region59: #{tpu_custom_call.1} parent=55 // pred_region
          %401 = dma.done %s394, 128
        $region60: #{tpu_custom_call.1} parent=55 // pred_fallthru
          _
        %s402 = sand.u32 %s46, 1
        %s403 = scalar_lea.sflag [#allocation4], %s402
        %s404 = sand.u32 %s46, 1
        %s405 = smul.addr %s404, 8
        %s406 = scalar_lea.vmem [#allocation3], %s405
        %p407 = pneg %p59
        %p408 = pneg %p56
        %p409 = scmp.lt.s32.totalorder %s31, 1
        %s410 = scalar_select %p409, %s31, 1
        %s411 = smul.addr %s410, 4
        %s412 = smul.addr %s411, 4
        %s413 = scalar_lea.vmem %s1, %s412
        %p414 = pneg %p85
        %p415 = pneg %p82
        %p416 = scmp.lt.s32.totalorder %s31, 1
        %s417 = scalar_select %p416, %s31, 1
        %s418 = scalar_lea.vmem %s2, %s417
        %p419 = pneg %p111
        %p420 = pneg %p108
        %p421 = scmp.lt.s32.totalorder %s31, 1
        %s422 = scalar_select %p421, %s31, 1
        %s423 = smul.addr %s422, 4
        %s424 = smul.addr %s423, 4
        %s425 = scalar_lea.vmem %s3, %s424
        %p426 = pneg %p137
        %p427 = pneg %p134
        %p428 = scmp.lt.s32.totalorder %s31, 1
        %s429 = scalar_select %p428, %s31, 1
        %s430 = scalar_lea.vmem %s4, %s429
        %p431 = pneg %p163
        %p432 = pneg %p160
        %p433 = scmp.lt.s32.totalorder %s31, 1
        %s434 = scalar_select %p433, %s31, 1
        %s435 = smul.addr %s434, 4
        %s436 = smul.addr %s435, 4
        %s437 = scalar_lea.vmem %s5, %s436
        %p438 = pneg %p189
        %p439 = pneg %p186
        %p440 = scmp.lt.s32.totalorder %s31, 1
        %s441 = scalar_select %p440, %s31, 1
        %s442 = scalar_lea.vmem %s6, %s441
        %p443 = pneg %p215
        %p444 = pneg %p212
        %p445 = scmp.lt.s32.totalorder %s31, 1
        %s446 = scalar_select %p445, %s31, 1
        %s447 = smul.addr %s446, 8
        %s448 = smul.addr %s447, 4
        %s449 = scalar_lea.vmem %s7, %s448
        %p450 = pneg %p241
        %p451 = pneg %p238
        %p452 = scmp.lt.s32.totalorder %s31, 1
        %s453 = scalar_select %p452, %s31, 1
        %s454 = scalar_lea.vmem %s8, %s453
        %p455 = pneg %p267
        %p456 = pneg %p264
        %p457 = pneg %p293
        %p458 = pneg %p290
        %s459 = sand.u32 %s280, 1
        %s460 = scalar_lea.sflag [#allocation5], %s459
        %s461 = sand.u32 %s280, 1
        %s462 = smul.addr %s461, 8
        %s463 = scalar_lea.vmem [#allocation6], %s462
        %p464 = scmp.lt.s32.totalorder %s31, 1
        %s465 = scalar_select %p464, %s31, 1
        %s466 = smul.addr %s465, 4
        %s467 = smul.addr %s466, 4
        %s468 = scalar_lea.vmem %s1, %s467
        %p469 = scmp.lt.s32.totalorder %s31, 1
        %s470 = scalar_select %p469, %s31, 1
        %s471 = scalar_lea.vmem %s2, %s470
        %p472 = scmp.lt.s32.totalorder %s31, 1
        %s473 = scalar_select %p472, %s31, 1
        %s474 = smul.addr %s473, 4
        %s475 = smul.addr %s474, 4
        %s476 = scalar_lea.vmem %s3, %s475
        %p477 = scmp.lt.s32.totalorder %s31, 1
        %s478 = scalar_select %p477, %s31, 1
        %s479 = scalar_lea.vmem %s4, %s478
        %p480 = scmp.lt.s32.totalorder %s31, 1
        %s481 = scalar_select %p480, %s31, 1
        %s482 = smul.addr %s481, 4
        %s483 = smul.addr %s482, 4
        %s484 = scalar_lea.vmem %s5, %s483
        %p485 = scmp.lt.s32.totalorder %s31, 1
        %s486 = scalar_select %p485, %s31, 1
        %s487 = scalar_lea.vmem %s6, %s486
        %p488 = scmp.lt.s32.totalorder %s31, 1
        %s489 = scalar_select %p488, %s31, 1
        %s490 = smul.addr %s489, 8
        %s491 = smul.addr %s490, 4
        %s492 = scalar_lea.vmem %s7, %s491
        %p493 = scmp.lt.s32.totalorder %s31, 1
        %s494 = scalar_select %p493, %s31, 1
        %s495 = scalar_lea.vmem %s8, %s494
        %p497 = scmp.eq.s32.totalorder %s31, 0
        // Predicated region
        $region61: #{tpu_custom_call.1} parent=55 // pred_check
          %p498 = pneg %p497
        $region62: #{tpu_custom_call.1} parent=55 // pred_check_branch
          %500 = sbr.rel (%p498) target = $region64
        $region63: #{tpu_custom_call.1} parent=55 // pred_region
          %v501 = vld [vmem:[%s397] sm:$0xff]
          %vm502 = vcmask 261120
          %503 = vst.msk [vmem:[#allocation2] sm:$0xff] %vm502, %v501
        $region64: #{tpu_custom_call.1} parent=55 // pred_fallthru
          _
        %v504 = vld [vmem:[#allocation2] sm:$0xff]
        %vm505 = vcmask 261120
        %v506 = vsel %vm505, %v504, 0.0
        %507 = vadd.xlane.f32.xlu0 %v506
        %v508 = vpop.xlane.xlu0 %507
        %v509 = vrcp.pop 32.0
        %v510 = vmul.f32 %v508, %v509
        %v511 = vsub.f32 %v504, %v510
        %v512 = vmul.f32 %v511, %v511
        %v513 = vsel %vm505, %v512, 0.0
        %514 = vadd.xlane.f32.xlu0 %v513
        %v515 = vpop.xlane.xlu0 %514
        %v516 = vmul.f32 %v515, %v509
        %v517 = vadd.f32 %v516, 1e-05
        %v518 = vrsqrt.pop %v517
        %v519 = vmul.f32 %v511, %v518
        %v520 = vpack.c.bf16 %v519, %v519
        %v521 = vld [vmem:[%s468] sm:$0xf]
        %v522 = vld [vmem:[%s468 + $0x4] sm:$0xf]
        %v523 = vld [vmem:[%s468 + $0x8] sm:$0xf]
        %v524 = vld [vmem:[%s468 + $0xc] sm:$0xf]
        %v525 = vld [vmem:[%s471] sm:$0x1]
        %v527 = vlaneseq
        %v528 = vshrl.u32 %v527, 7
        %v529 = vsub.s32 0, %v528
        %v530 = vrot.slane %v525, %v529
        %v536 = vunpack.c.l.b16 %v521
        %v537 = vunpack.c.l.b16 %v522
        %v538 = vunpack.c.l.b16 %v523
        %v539 = vunpack.c.l.b16 %v524
        %v540 = vpack.c.b16 %v537, %v536
        %v541 = vpack.c.b16 %v539, %v538
        %v545 = vsel %vm505, %v520, 0
        %547 = vmatprep.subr.bf16.mxu0 0
        %548 = vmatpush1.bf16.msra.mxu0 %v540
        %549 = vmatprep.subr.bf16.mxu0 0
        %550 = vmatpush1.bf16.msra.mxu0 %v541
        %551 = vmatprep.subr.bf16.mxu0 0
        %552 = vmatpush1.bf16.msra.mxu0 0
        %553 = vmatprep.subr.bf16.mxu0 0
        %554 = vmatpush1.bf16.msra.mxu0 0
        %555 = vmatprep.subr.bf16.mxu0 0
        %556 = vmatpush1.bf16.msra.mxu0 0
        %557 = vmatprep.subr.bf16.mxu0 0
        %558 = vmatpush1.bf16.msra.mxu0 0
        %559 = vmatprep.subr.bf16.mxu0 0
        %560 = vmatpush1.bf16.msra.mxu0 0
        %561 = vmatprep.subr.bf16.mxu0 0
        %562 = vmatpush1.bf16.msra.mxu0 0
        %563 = vmatprep.subr.bf16.mxu0 0
        %564 = vmatpush1.bf16.msra.mxu0 0
        %565 = vmatprep.subr.bf16.mxu0 0
        %566 = vmatpush1.bf16.msra.mxu0 0
        %567 = vmatprep.subr.bf16.mxu0 0
        %568 = vmatpush1.bf16.msra.mxu0 0
        %569 = vmatprep.subr.bf16.mxu0 0
        %570 = vmatpush1.bf16.msra.mxu0 0
        %571 = vmatprep.subr.bf16.mxu0 0
        %572 = vmatpush1.bf16.msra.mxu0 0
        %573 = vmatprep.subr.bf16.mxu0 0
        %574 = vmatpush1.bf16.msra.mxu0 0
        %575 = vmatprep.subr.bf16.mxu0 0
        %576 = vmatpush1.bf16.msra.mxu0 0
        %577 = vmatprep.subr.bf16.mxu0 0
        %578 = vmatpush1.bf16.msra.mxu0 0
        %579 = vmatprep.mubr.bf16.mxu0 0
        %580 = vmatmul.mubr.bf16.gmra.mrb[0].mxu0 %v545
        %v581 = vpop.f32.mrb[0].mxu0
        %v582 = vadd.f32 %v530, %v581
        %v583 = vpop.f32.mrb[0].mxu0
        %v584 = vpop.f32.mrb[0].mxu0
        %v585 = vpop.f32.mrb[0].mxu0
        %586 = vdwg.mxu0
        %v587 = vld [vmem:[%s479] sm:$0x1]
        %v589 = vlaneseq
        %v590 = vshrl.u32 %v589, 7
        %v591 = vsub.s32 0, %v590
        %v592 = vrot.slane %v587, %v591
        %v594 = vadd.f32 %v504, %v592
        %v595 = vpack.c.bf16 %v582, %v582
        %597 = vrot.lane.b32.xlu0 %v595, 96
        %v598 = vpop.permute.xlu0 %597
        %vm599 = vcmask 64512
        %v601 = vsel %vm599, %v595, 0
        %v604 = vsel %vm599, %v598, 0
        %606 = vmatprep.subr.bf16.mxu0 0
        %607 = vmatpush1.bf16.xpose.msra.mxu0 %v604
        %608 = vmatprep.subr.bf16.mxu0 0
        %609 = vmatpush1.bf16.xpose.msra.mxu0 0
        %610 = vmatprep.subr.bf16.mxu0 0
        %611 = vmatpush1.bf16.xpose.msra.mxu0 0
        %612 = vmatprep.subr.bf16.mxu0 0
        %613 = vmatpush1.bf16.xpose.msra.mxu0 0
        %614 = vmatprep.subr.bf16.mxu0 0
        %615 = vmatpush1.bf16.xpose.msra.mxu0 0
        %616 = vmatprep.subr.bf16.mxu0 0
        %617 = vmatpush1.bf16.xpose.msra.mxu0 0
        %618 = vmatprep.subr.bf16.mxu0 0
        %619 = vmatpush1.bf16.xpose.msra.mxu0 0
        %620 = vmatprep.subr.bf16.mxu0 0
        %621 = vmatpush1.bf16.xpose.msra.mxu0 0
        %622 = vmatprep.subr.bf16.mxu0 0
        %623 = vmatpush1.bf16.xpose.msra.mxu0 0
        %624 = vmatprep.subr.bf16.mxu0 0
        %625 = vmatpush1.bf16.xpose.msra.mxu0 0
        %626 = vmatprep.subr.bf16.mxu0 0
        %627 = vmatpush1.bf16.xpose.msra.mxu0 0
        %628 = vmatprep.subr.bf16.mxu0 0
        %629 = vmatpush1.bf16.xpose.msra.mxu0 0
        %630 = vmatprep.subr.bf16.mxu0 0
        %631 = vmatpush1.bf16.xpose.msra.mxu0 0
        %632 = vmatprep.subr.bf16.mxu0 0
        %633 = vmatpush1.bf16.xpose.msra.mxu0 0
        %634 = vmatprep.subr.bf16.mxu0 0
        %635 = vmatpush1.bf16.xpose.msra.mxu0 0
        %636 = vmatprep.subr.bf16.mxu0 0
        %637 = vmatpush1.bf16.xpose.msra.mxu0 0
        %638 = vmatprep.mubr.bf16.mxu0 0
        %639 = vmatmul.mubr.bf16.gmra.mrb[0].mxu0 %v601
        %v640 = vpop.f32.mrb[0].mxu0
        %v641 = vadd.f32 0.0, %v640
        %v642 = vpop.f32.mrb[0].mxu0
        %v643 = vpop.f32.mrb[0].mxu0
        %v644 = vpop.f32.mrb[0].mxu0
        %645 = vdwg.mxu0
        %v646 = vsel %vm599, %v641, -inf
        %647 = vmax.xlane.f32.xlu0 %v646
        %v648 = vpop.xlane.xlu0 %647
        %v649 = vsub.f32 %v641, %v648
        %v650 = vmul.f32 %v649, 1.442695
        %v651 = vpow.pop %v650
        %v652 = vsel %vm599, %v651, 0.0
        %653 = vadd.xlane.f32.xlu0 %v652
        %v654 = vpop.xlane.xlu0 %653
        %v655 = vrcp.pop %v654
        %v656 = vpack.c.bf16 %v651, %v651
        %657 = vrot.lane.b32.xlu0 %v595, 64
        %v658 = vpop.permute.xlu0 %657
        %v660 = vsel %vm599, %v656, 0
        %vm662 = vcmask 1043456
        %v664 = vsel %vm662, %v658, 0
        %666 = vmatprep.subr.bf16.mxu0 0
        %667 = vmatpush1.bf16.msra.mxu0 %v664
        %668 = vmatprep.subr.bf16.mxu0 0
        %669 = vmatpush1.bf16.msra.mxu0 0
        %670 = vmatprep.subr.bf16.mxu0 0
        %671 = vmatpush1.bf16.msra.mxu0 0
        %672 = vmatprep.subr.bf16.mxu0 0
        %673 = vmatpush1.bf16.msra.mxu0 0
        %674 = vmatprep.subr.bf16.mxu0 0
        %675 = vmatpush1.bf16.msra.mxu0 0
        %676 = vmatprep.subr.bf16.mxu0 0
        %677 = vmatpush1.bf16.msra.mxu0 0
        %678 = vmatprep.subr.bf16.mxu0 0
        %679 = vmatpush1.bf16.msra.mxu0 0
        %680 = vmatprep.subr.bf16.mxu0 0
        %681 = vmatpush1.bf16.msra.mxu0 0
        %682 = vmatprep.subr.bf16.mxu0 0
        %683 = vmatpush1.bf16.msra.mxu0 0
        %684 = vmatprep.subr.bf16.mxu0 0
        %685 = vmatpush1.bf16.msra.mxu0 0
        %686 = vmatprep.subr.bf16.mxu0 0
        %687 = vmatpush1.bf16.msra.mxu0 0
        %688 = vmatprep.subr.bf16.mxu0 0
        %689 = vmatpush1.bf16.msra.mxu0 0
        %690 = vmatprep.subr.bf16.mxu0 0
        %691 = vmatpush1.bf16.msra.mxu0 0
        %692 = vmatprep.subr.bf16.mxu0 0
        %693 = vmatpush1.bf16.msra.mxu0 0
        %694 = vmatprep.subr.bf16.mxu0 0
        %695 = vmatpush1.bf16.msra.mxu0 0
        %696 = vmatprep.subr.bf16.mxu0 0
        %697 = vmatpush1.bf16.msra.mxu0 0
        %698 = vmatprep.mubr.bf16.mxu0 0
        %699 = vmatmul.mubr.bf16.gmra.mrb[0].mxu0 %v660
        %v700 = vpop.f32.mrb[0].mxu0
        %v701 = vadd.f32 0.0, %v700
        %v702 = vpop.f32.mrb[0].mxu0
        %v703 = vpop.f32.mrb[0].mxu0
        %v704 = vpop.f32.mrb[0].mxu0
        %705 = vdwg.mxu0
        %v706 = vmul.f32 %v701, %v655
        %v707 = vpack.c.bf16 %v706, %v706
        %v708 = vld [vmem:[%s476] sm:$0xf]
        %v710 = vsel %vm599, %v707, 0
        %v713 = vsel %vm662, %v708, 0
        %715 = vmatprep.subr.bf16.mxu0 0
        %716 = vmatpush1.bf16.msra.mxu0 %v713
        %717 = vmatprep.subr.bf16.mxu0 0
        %718 = vmatpush1.bf16.msra.mxu0 0
        %719 = vmatprep.subr.bf16.mxu0 0
        %720 = vmatpush1.bf16.msra.mxu0 0
        %721 = vmatprep.subr.bf16.mxu0 0
        %722 = vmatpush1.bf16.msra.mxu0 0
        %723 = vmatprep.subr.bf16.mxu0 0
        %724 = vmatpush1.bf16.msra.mxu0 0
        %725 = vmatprep.subr.bf16.mxu0 0
        %726 = vmatpush1.bf16.msra.mxu0 0
        %727 = vmatprep.subr.bf16.mxu0 0
        %728 = vmatpush1.bf16.msra.mxu0 0
        %729 = vmatprep.subr.bf16.mxu0 0
        %730 = vmatpush1.bf16.msra.mxu0 0
        %731 = vmatprep.subr.bf16.mxu0 0
        %732 = vmatpush1.bf16.msra.mxu0 0
        %733 = vmatprep.subr.bf16.mxu0 0
        %734 = vmatpush1.bf16.msra.mxu0 0
        %735 = vmatprep.subr.bf16.mxu0 0
        %736 = vmatpush1.bf16.msra.mxu0 0
        %737 = vmatprep.subr.bf16.mxu0 0
        %738 = vmatpush1.bf16.msra.mxu0 0
        %739 = vmatprep.subr.bf16.mxu0 0
        %740 = vmatpush1.bf16.msra.mxu0 0
        %741 = vmatprep.subr.bf16.mxu0 0
        %742 = vmatpush1.bf16.msra.mxu0 0
        %743 = vmatprep.subr.bf16.mxu0 0
        %744 = vmatpush1.bf16.msra.mxu0 0
        %745 = vmatprep.subr.bf16.mxu0 0
        %746 = vmatpush1.bf16.msra.mxu0 0
        %747 = vmatprep.mubr.bf16.mxu0 0
        %748 = vmatmul.mubr.bf16.gmra.mrb[0].mxu0 %v710
        %v749 = vpop.f32.mrb[0].mxu0
        %v750 = vadd.f32 0.0, %v749
        %v751 = vpop.f32.mrb[0].mxu0
        %v752 = vpop.f32.mrb[0].mxu0
        %v753 = vpop.f32.mrb[0].mxu0
        %754 = vdwg.mxu0
        %v755 = vadd.f32 %v594, %v750
        %756 = vrot.lane.b32.xlu0 %v595, 120
        %v757 = vpop.permute.xlu0 %756
        %758 = vrot.lane.b32.xlu0 %v595, 88
        %v759 = vpop.permute.xlu0 %758
        %v761 = vsel %vm599, %v757, 0
        %v764 = vsel %vm599, %v759, 0
        %766 = vmatprep.subr.bf16.mxu0 0
        %767 = vmatpush1.bf16.xpose.msra.mxu0 %v764
        %768 = vmatprep.subr.bf16.mxu0 0
        %769 = vmatpush1.bf16.xpose.msra.mxu0 0
        %770 = vmatprep.subr.bf16.mxu0 0
        %771 = vmatpush1.bf16.xpose.msra.mxu0 0
        %772 = vmatprep.subr.bf16.mxu0 0
        %773 = vmatpush1.bf16.xpose.msra.mxu0 0
        %774 = vmatprep.subr.bf16.mxu0 0
        %775 = vmatpush1.bf16.xpose.msra.mxu0 0
        %776 = vmatprep.subr.bf16.mxu0 0
        %777 = vmatpush1.bf16.xpose.msra.mxu0 0
        %778 = vmatprep.subr.bf16.mxu0 0
        %779 = vmatpush1.bf16.xpose.msra.mxu0 0
        %780 = vmatprep.subr.bf16.mxu0 0
        %781 = vmatpush1.bf16.xpose.msra.mxu0 0
        %782 = vmatprep.subr.bf16.mxu0 0
        %783 = vmatpush1.bf16.xpose.msra.mxu0 0
        %784 = vmatprep.subr.bf16.mxu0 0
        %785 = vmatpush1.bf16.xpose.msra.mxu0 0
        %786 = vmatprep.subr.bf16.mxu0 0
        %787 = vmatpush1.bf16.xpose.msra.mxu0 0
        %788 = vmatprep.subr.bf16.mxu0 0
        %789 = vmatpush1.bf16.xpose.msra.mxu0 0
        %790 = vmatprep.subr.bf16.mxu0 0
        %791 = vmatpush1.bf16.xpose.msra.mxu0 0
        %792 = vmatprep.subr.bf16.mxu0 0
        %793 = vmatpush1.bf16.xpose.msra.mxu0 0
        %794 = vmatprep.subr.bf16.mxu0 0
        %795 = vmatpush1.bf16.xpose.msra.mxu0 0
        %796 = vmatprep.subr.bf16.mxu0 0
        %797 = vmatpush1.bf16.xpose.msra.mxu0 0
        %798 = vmatprep.mubr.bf16.mxu0 0
        %799 = vmatmul.mubr.bf16.gmra.mrb[0].mxu0 %v761
        %v800 = vpop.f32.mrb[0].mxu0
        %v801 = vadd.f32 0.0, %v800
        %v802 = vpop.f32.mrb[0].mxu0
        %v803 = vpop.f32.mrb[0].mxu0
        %v804 = vpop.f32.mrb[0].mxu0
        %805 = vdwg.mxu0
        %v806 = vsel %vm599, %v801, -inf
        %807 = vmax.xlane.f32.xlu0 %v806
        %v808 = vpop.xlane.xlu0 %807
        %v809 = vsub.f32 %v801, %v808
        %v810 = vmul.f32 %v809, 1.442695
        %v811 = vpow.pop %v810
        %v812 = vsel %vm599, %v811, 0.0
        %813 = vadd.xlane.f32.xlu0 %v812
        %v814 = vpop.xlane.xlu0 %813
        %v815 = vrcp.pop %v814
        %v816 = vpack.c.bf16 %v811, %v811
        %817 = vrot.lane.b32.xlu0 %v595, 56
        %v818 = vpop.permute.xlu0 %817
        %v820 = vsel %vm599, %v816, 0
        %v823 = vsel %vm662, %v818, 0
        %825 = vmatprep.subr.bf16.mxu0 0
        %826 = vmatpush1.bf16.msra.mxu0 %v823
        %827 = vmatprep.subr.bf16.mxu0 0
        %828 = vmatpush1.bf16.msra.mxu0 0
        %829 = vmatprep.subr.bf16.mxu0 0
        %830 = vmatpush1.bf16.msra.mxu0 0
        %831 = vmatprep.subr.bf16.mxu0 0
        %832 = vmatpush1.bf16.msra.mxu0 0
        %833 = vmatprep.subr.bf16.mxu0 0
        %834 = vmatpush1.bf16.msra.mxu0 0
        %835 = vmatprep.subr.bf16.mxu0 0
        %836 = vmatpush1.bf16.msra.mxu0 0
        %837 = vmatprep.subr.bf16.mxu0 0
        %838 = vmatpush1.bf16.msra.mxu0 0
        %839 = vmatprep.subr.bf16.mxu0 0
        %840 = vmatpush1.bf16.msra.mxu0 0
        %841 = vmatprep.subr.bf16.mxu0 0
        %842 = vmatpush1.bf16.msra.mxu0 0
        %843 = vmatprep.subr.bf16.mxu0 0
        %844 = vmatpush1.bf16.msra.mxu0 0
        %845 = vmatprep.subr.bf16.mxu0 0
        %846 = vmatpush1.bf16.msra.mxu0 0
        %847 = vmatprep.subr.bf16.mxu0 0
        %848 = vmatpush1.bf16.msra.mxu0 0
        %849 = vmatprep.subr.bf16.mxu0 0
        %850 = vmatpush1.bf16.msra.mxu0 0
        %851 = vmatprep.subr.bf16.mxu0 0
        %852 = vmatpush1.bf16.msra.mxu0 0
        %853 = vmatprep.subr.bf16.mxu0 0
        %854 = vmatpush1.bf16.msra.mxu0 0
        %855 = vmatprep.subr.bf16.mxu0 0
        %856 = vmatpush1.bf16.msra.mxu0 0
        %857 = vmatprep.mubr.bf16.mxu0 0
        %858 = vmatmul.mubr.bf16.gmra.mrb[0].mxu0 %v820
        %v859 = vpop.f32.mrb[0].mxu0
        %v860 = vadd.f32 0.0, %v859
        %v861 = vpop.f32.mrb[0].mxu0
        %v862 = vpop.f32.mrb[0].mxu0
        %v863 = vpop.f32.mrb[0].mxu0
        %864 = vdwg.mxu0
        %v865 = vmul.f32 %v860, %v815
        %v866 = vpack.c.bf16 %v865, %v865
        %s867 = scalar_lea.vmem %s476, 4
        %v868 = vld [vmem:[%s867] sm:$0xf]
        %v870 = vsel %vm599, %v866, 0
        %v873 = vsel %vm662, %v868, 0
        %875 = vmatprep.subr.bf16.mxu0 0
        %876 = vmatpush1.bf16.msra.mxu0 %v873
        %877 = vmatprep.subr.bf16.mxu0 0
        %878 = vmatpush1.bf16.msra.mxu0 0
        %879 = vmatprep.subr.bf16.mxu0 0
        %880 = vmatpush1.bf16.msra.mxu0 0
        %881 = vmatprep.subr.bf16.mxu0 0
        %882 = vmatpush1.bf16.msra.mxu0 0
        %883 = vmatprep.subr.bf16.mxu0 0
        %884 = vmatpush1.bf16.msra.mxu0 0
        %885 = vmatprep.subr.bf16.mxu0 0
        %886 = vmatpush1.bf16.msra.mxu0 0
        %887 = vmatprep.subr.bf16.mxu0 0
        %888 = vmatpush1.bf16.msra.mxu0 0
        %889 = vmatprep.subr.bf16.mxu0 0
        %890 = vmatpush1.bf16.msra.mxu0 0
        %891 = vmatprep.subr.bf16.mxu0 0
        %892 = vmatpush1.bf16.msra.mxu0 0
        %893 = vmatprep.subr.bf16.mxu0 0
        %894 = vmatpush1.bf16.msra.mxu0 0
        %895 = vmatprep.subr.bf16.mxu0 0
        %896 = vmatpush1.bf16.msra.mxu0 0
        %897 = vmatprep.subr.bf16.mxu0 0
        %898 = vmatpush1.bf16.msra.mxu0 0
        %899 = vmatprep.subr.bf16.mxu0 0
        %900 = vmatpush1.bf16.msra.mxu0 0
        %901 = vmatprep.subr.bf16.mxu0 0
        %902 = vmatpush1.bf16.msra.mxu0 0
        %903 = vmatprep.subr.bf16.mxu0 0
        %904 = vmatpush1.bf16.msra.mxu0 0
        %905 = vmatprep.subr.bf16.mxu0 0
        %906 = vmatpush1.bf16.msra.mxu0 0
        %907 = vmatprep.mubr.bf16.mxu0 0
        %908 = vmatmul.mubr.bf16.gmra.mrb[0].mxu0 %v870
        %v909 = vpop.f32.mrb[0].mxu0
        %v910 = vadd.f32 0.0, %v909
        %v911 = vpop.f32.mrb[0].mxu0
        %v912 = vpop.f32.mrb[0].mxu0
        %v913 = vpop.f32.mrb[0].mxu0
        %914 = vdwg.mxu0
        %v915 = vadd.f32 %v755, %v910
        %916 = vrot.lane.b32.xlu0 %v595, 112
        %v917 = vpop.permute.xlu0 %916
        %918 = vrot.lane.b32.xlu0 %v595, 80
        %v919 = vpop.permute.xlu0 %918
        %v921 = vsel %vm599, %v917, 0
        %v924 = vsel %vm599, %v919, 0
        %926 = vmatprep.subr.bf16.mxu0 0
        %927 = vmatpush1.bf16.xpose.msra.mxu0 %v924
        %928 = vmatprep.subr.bf16.mxu0 0
        %929 = vmatpush1.bf16.xpose.msra.mxu0 0
        %930 = vmatprep.subr.bf16.mxu0 0
        %931 = vmatpush1.bf16.xpose.msra.mxu0 0
        %932 = vmatprep.subr.bf16.mxu0 0
        %933 = vmatpush1.bf16.xpose.msra.mxu0 0
        %934 = vmatprep.subr.bf16.mxu0 0
        %935 = vmatpush1.bf16.xpose.msra.mxu0 0
        %936 = vmatprep.subr.bf16.mxu0 0
        %937 = vmatpush1.bf16.xpose.msra.mxu0 0
        %938 = vmatprep.subr.bf16.mxu0 0
        %939 = vmatpush1.bf16.xpose.msra.mxu0 0
        %940 = vmatprep.subr.bf16.mxu0 0
        %941 = vmatpush1.bf16.xpose.msra.mxu0 0
        %942 = vmatprep.subr.bf16.mxu0 0
        %943 = vmatpush1.bf16.xpose.msra.mxu0 0
        %944 = vmatprep.subr.bf16.mxu0 0
        %945 = vmatpush1.bf16.xpose.msra.mxu0 0
        %946 = vmatprep.subr.bf16.mxu0 0
        %947 = vmatpush1.bf16.xpose.msra.mxu0 0
        %948 = vmatprep.subr.bf16.mxu0 0
        %949 = vmatpush1.bf16.xpose.msra.mxu0 0
        %950 = vmatprep.subr.bf16.mxu0 0
        %951 = vmatpush1.bf16.xpose.msra.mxu0 0
        %952 = vmatprep.subr.bf16.mxu0 0
        %953 = vmatpush1.bf16.xpose.msra.mxu0 0
        %954 = vmatprep.subr.bf16.mxu0 0
        %955 = vmatpush1.bf16.xpose.msra.mxu0 0
        %956 = vmatprep.subr.bf16.mxu0 0
        %957 = vmatpush1.bf16.xpose.msra.mxu0 0
        %958 = vmatprep.mubr.bf16.mxu0 0
        %959 = vmatmul.mubr.bf16.gmra.mrb[0].mxu0 %v921
        %v960 = vpop.f32.mrb[0].mxu0
        %v961 = vadd.f32 0.0, %v960
        %v962 = vpop.f32.mrb[0].mxu0
        %v963 = vpop.f32.mrb[0].mxu0
        %v964 = vpop.f32.mrb[0].mxu0
        %965 = vdwg.mxu0
        %v966 = vsel %vm599, %v961, -inf
        %967 = vmax.xlane.f32.xlu0 %v966
        %v968 = vpop.xlane.xlu0 %967
        %v969 = vsub.f32 %v961, %v968
        %v970 = vmul.f32 %v969, 1.442695
        %v971 = vpow.pop %v970
        %v972 = vsel %vm599, %v971, 0.0
        %973 = vadd.xlane.f32.xlu0 %v972
        %v974 = vpop.xlane.xlu0 %973
        %v975 = vrcp.pop %v974
        %v976 = vpack.c.bf16 %v971, %v971
        %977 = vrot.lane.b32.xlu0 %v595, 48
        %v978 = vpop.permute.xlu0 %977
        %v980 = vsel %vm599, %v976, 0
        %v983 = vsel %vm662, %v978, 0
        %985 = vmatprep.subr.bf16.mxu0 0
        %986 = vmatpush1.bf16.msra.mxu0 %v983
        %987 = vmatprep.subr.bf16.mxu0 0
        %988 = vmatpush1.bf16.msra.mxu0 0
        %989 = vmatprep.subr.bf16.mxu0 0
        %990 = vmatpush1.bf16.msra.mxu0 0
        %991 = vmatprep.subr.bf16.mxu0 0
        %992 = vmatpush1.bf16.msra.mxu0 0
        %993 = vmatprep.subr.bf16.mxu0 0
        %994 = vmatpush1.bf16.msra.mxu0 0
        %995 = vmatprep.subr.bf16.mxu0 0
        %996 = vmatpush1.bf16.msra.mxu0 0
        %997 = vmatprep.subr.bf16.mxu0 0
        %998 = vmatpush1.bf16.msra.mxu0 0
        %999 = vmatprep.subr.bf16.mxu0 0
        %1000 = vmatpush1.bf16.msra.mxu0 0
        %1001 = vmatprep.subr.bf16.mxu0 0
        %1002 = vmatpush1.bf16.msra.mxu0 0
        %1003 = vmatprep.subr.bf16.mxu0 0
        %1004 = vmatpush1.bf16.msra.mxu0 0
        %1005 = vmatprep.subr.bf16.mxu0 0
        %1006 = vmatpush1.bf16.msra.mxu0 0
        %1007 = vmatprep.subr.bf16.mxu0 0
        %1008 = vmatpush1.bf16.msra.mxu0 0
        %1009 = vmatprep.subr.bf16.mxu0 0
        %1010 = vmatpush1.bf16.msra.mxu0 0
        %1011 = vmatprep.subr.bf16.mxu0 0
        %1012 = vmatpush1.bf16.msra.mxu0 0
        %1013 = vmatprep.subr.bf16.mxu0 0
        %1014 = vmatpush1.bf16.msra.mxu0 0
        %1015 = vmatprep.subr.bf16.mxu0 0
        %1016 = vmatpush1.bf16.msra.mxu0 0
        %1017 = vmatprep.mubr.bf16.mxu0 0
        %1018 = vmatmul.mubr.bf16.gmra.mrb[0].mxu0 %v980
        %v1019 = vpop.f32.mrb[0].mxu0
        %v1020 = vadd.f32 0.0, %v1019
        %v1021 = vpop.f32.mrb[0].mxu0
        %v1022 = vpop.f32.mrb[0].mxu0
        %v1023 = vpop.f32.mrb[0].mxu0
        %1024 = vdwg.mxu0
        %v1025 = vmul.f32 %v1020, %v975
        %v1026 = vpack.c.bf16 %v1025, %v1025
        %s1027 = scalar_lea.vmem %s476, 8
        %v1028 = vld [vmem:[%s1027] sm:$0xf]
        %v1030 = vsel %vm599, %v1026, 0
        %v1033 = vsel %vm662, %v1028, 0
        %1035 = vmatprep.subr.bf16.mxu0 0
        %1036 = vmatpush1.bf16.msra.mxu0 %v1033
        %1037 = vmatprep.subr.bf16.mxu0 0
        %1038 = vmatpush1.bf16.msra.mxu0 0
        %1039 = vmatprep.subr.bf16.mxu0 0
        %1040 = vmatpush1.bf16.msra.mxu0 0
        %1041 = vmatprep.subr.bf16.mxu0 0
        %1042 = vmatpush1.bf16.msra.mxu0 0
        %1043 = vmatprep.subr.bf16.mxu0 0
        %1044 = vmatpush1.bf16.msra.mxu0 0
        %1045 = vmatprep.subr.bf16.mxu0 0
        %1046 = vmatpush1.bf16.msra.mxu0 0
        %1047 = vmatprep.subr.bf16.mxu0 0
        %1048 = vmatpush1.bf16.msra.mxu0 0
        %1049 = vmatprep.subr.bf16.mxu0 0
        %1050 = vmatpush1.bf16.msra.mxu0 0
        %1051 = vmatprep.subr.bf16.mxu0 0
        %1052 = vmatpush1.bf16.msra.mxu0 0
        %1053 = vmatprep.subr.bf16.mxu0 0
        %1054 = vmatpush1.bf16.msra.mxu0 0
        %1055 = vmatprep.subr.bf16.mxu0 0
        %1056 = vmatpush1.bf16.msra.mxu0 0
        %1057 = vmatprep.subr.bf16.mxu0 0
        %1058 = vmatpush1.bf16.msra.mxu0 0
        %1059 = vmatprep.subr.bf16.mxu0 0
        %1060 = vmatpush1.bf16.msra.mxu0 0
        %1061 = vmatprep.subr.bf16.mxu0 0
        %1062 = vmatpush1.bf16.msra.mxu0 0
        %1063 = vmatprep.subr.bf16.mxu0 0
        %1064 = vmatpush1.bf16.msra.mxu0 0
        %1065 = vmatprep.subr.bf16.mxu0 0
        %1066 = vmatpush1.bf16.msra.mxu0 0
        %1067 = vmatprep.mubr.bf16.mxu0 0
        %1068 = vmatmul.mubr.bf16.gmra.mrb[0].mxu0 %v1030
        %v1069 = vpop.f32.mrb[0].mxu0
        %v1070 = vadd.f32 0.0, %v1069
        %v1071 = vpop.f32.mrb[0].mxu0
        %v1072 = vpop.f32.mrb[0].mxu0
        %v1073 = vpop.f32.mrb[0].mxu0
        %1074 = vdwg.mxu0
        %v1075 = vadd.f32 %v915, %v1070
        %1076 = vrot.lane.b32.xlu0 %v595, 104
        %v1077 = vpop.permute.xlu0 %1076
        %1078 = vrot.lane.b32.xlu0 %v595, 72
        %v1079 = vpop.permute.xlu0 %1078
        %v1081 = vsel %vm599, %v1077, 0
        %v1084 = vsel %vm599, %v1079, 0
        %1086 = vmatprep.subr.bf16.mxu0 0
        %1087 = vmatpush1.bf16.xpose.msra.mxu0 %v1084
        %1088 = vmatprep.subr.bf16.mxu0 0
        %1089 = vmatpush1.bf16.xpose.msra.mxu0 0
        %1090 = vmatprep.subr.bf16.mxu0 0
        %1091 = vmatpush1.bf16.xpose.msra.mxu0 0
        %1092 = vmatprep.subr.bf16.mxu0 0
        %1093 = vmatpush1.bf16.xpose.msra.mxu0 0
        %1094 = vmatprep.subr.bf16.mxu0 0
        %1095 = vmatpush1.bf16.xpose.msra.mxu0 0
        %1096 = vmatprep.subr.bf16.mxu0 0
        %1097 = vmatpush1.bf16.xpose.msra.mxu0 0
        %1098 = vmatprep.subr.bf16.mxu0 0
        %1099 = vmatpush1.bf16.xpose.msra.mxu0 0
        %1100 = vmatprep.subr.bf16.mxu0 0
        %1101 = vmatpush1.bf16.xpose.msra.mxu0 0
        %1102 = vmatprep.subr.bf16.mxu0 0
        %1103 = vmatpush1.bf16.xpose.msra.mxu0 0
        %1104 = vmatprep.subr.bf16.mxu0 0
        %1105 = vmatpush1.bf16.xpose.msra.mxu0 0
        %1106 = vmatprep.subr.bf16.mxu0 0
        %1107 = vmatpush1.bf16.xpose.msra.mxu0 0
        %1108 = vmatprep.subr.bf16.mxu0 0
        %1109 = vmatpush1.bf16.xpose.msra.mxu0 0
        %1110 = vmatprep.subr.bf16.mxu0 0
        %1111 = vmatpush1.bf16.xpose.msra.mxu0 0
        %1112 = vmatprep.subr.bf16.mxu0 0
        %1113 = vmatpush1.bf16.xpose.msra.mxu0 0
        %1114 = vmatprep.subr.bf16.mxu0 0
        %1115 = vmatpush1.bf16.xpose.msra.mxu0 0
        %1116 = vmatprep.subr.bf16.mxu0 0
        %1117 = vmatpush1.bf16.xpose.msra.mxu0 0
        %1118 = vmatprep.mubr.bf16.mxu0 0
        %1119 = vmatmul.mubr.bf16.gmra.mrb[0].mxu0 %v1081
        %v1120 = vpop.f32.mrb[0].mxu0
        %v1121 = vadd.f32 0.0, %v1120
        %v1122 = vpop.f32.mrb[0].mxu0
        %v1123 = vpop.f32.mrb[0].mxu0
        %v1124 = vpop.f32.mrb[0].mxu0
        %1125 = vdwg.mxu0
        %v1126 = vsel %vm599, %v1121, -inf
        %1127 = vmax.xlane.f32.xlu0 %v1126
        %v1128 = vpop.xlane.xlu0 %1127
        %v1129 = vsub.f32 %v1121, %v1128
        %v1130 = vmul.f32 %v1129, 1.442695
        %v1131 = vpow.pop %v1130
        %v1132 = vsel %vm599, %v1131, 0.0
        %1133 = vadd.xlane.f32.xlu0 %v1132
        %v1134 = vpop.xlane.xlu0 %1133
        %v1135 = vrcp.pop %v1134
        %v1136 = vpack.c.bf16 %v1131, %v1131
        %1137 = vrot.lane.b32.xlu0 %v595, 40
        %v1138 = vpop.permute.xlu0 %1137
        %v1140 = vsel %vm599, %v1136, 0
        %v1143 = vsel %vm662, %v1138, 0
        %1145 = vmatprep.subr.bf16.mxu0 0
        %1146 = vmatpush1.bf16.msra.mxu0 %v1143
        %1147 = vmatprep.subr.bf16.mxu0 0
        %1148 = vmatpush1.bf16.msra.mxu0 0
        %1149 = vmatprep.subr.bf16.mxu0 0
        %1150 = vmatpush1.bf16.msra.mxu0 0
        %1151 = vmatprep.subr.bf16.mxu0 0
        %1152 = vmatpush1.bf16.msra.mxu0 0
        %1153 = vmatprep.subr.bf16.mxu0 0
        %1154 = vmatpush1.bf16.msra.mxu0 0
        %1155 = vmatprep.subr.bf16.mxu0 0
        %1156 = vmatpush1.bf16.msra.mxu0 0
        %1157 = vmatprep.subr.bf16.mxu0 0
        %1158 = vmatpush1.bf16.msra.mxu0 0
        %1159 = vmatprep.subr.bf16.mxu0 0
        %1160 = vmatpush1.bf16.msra.mxu0 0
        %1161 = vmatprep.subr.bf16.mxu0 0
        %1162 = vmatpush1.bf16.msra.mxu0 0
        %1163 = vmatprep.subr.bf16.mxu0 0
        %1164 = vmatpush1.bf16.msra.mxu0 0
        %1165 = vmatprep.subr.bf16.mxu0 0
        %1166 = vmatpush1.bf16.msra.mxu0 0
        %1167 = vmatprep.subr.bf16.mxu0 0
        %1168 = vmatpush1.bf16.msra.mxu0 0
        %1169 = vmatprep.subr.bf16.mxu0 0
        %1170 = vmatpush1.bf16.msra.mxu0 0
        %1171 = vmatprep.subr.bf16.mxu0 0
        %1172 = vmatpush1.bf16.msra.mxu0 0
        %1173 = vmatprep.subr.bf16.mxu0 0
        %1174 = vmatpush1.bf16.msra.mxu0 0
        %1175 = vmatprep.subr.bf16.mxu0 0
        %1176 = vmatpush1.bf16.msra.mxu0 0
        %1177 = vmatprep.mubr.bf16.mxu0 0
        %1178 = vmatmul.mubr.bf16.gmra.mrb[0].mxu0 %v1140
        %v1179 = vpop.f32.mrb[0].mxu0
        %v1180 = vadd.f32 0.0, %v1179
        %v1181 = vpop.f32.mrb[0].mxu0
        %v1182 = vpop.f32.mrb[0].mxu0
        %v1183 = vpop.f32.mrb[0].mxu0
        %1184 = vdwg.mxu0
        %v1185 = vmul.f32 %v1180, %v1135
        %v1186 = vpack.c.bf16 %v1185, %v1185
        %s1187 = scalar_lea.vmem %s476, 12
        %v1188 = vld [vmem:[%s1187] sm:$0xf]
        %v1190 = vsel %vm599, %v1186, 0
        %v1193 = vsel %vm662, %v1188, 0
        %1195 = vmatprep.subr.bf16.mxu0 0
        %1196 = vmatpush1.bf16.msra.mxu0 %v1193
        %1197 = vmatprep.subr.bf16.mxu0 0
        %1198 = vmatpush1.bf16.msra.mxu0 0
        %1199 = vmatprep.subr.bf16.mxu0 0
        %1200 = vmatpush1.bf16.msra.mxu0 0
        %1201 = vmatprep.subr.bf16.mxu0 0
        %1202 = vmatpush1.bf16.msra.mxu0 0
        %1203 = vmatprep.subr.bf16.mxu0 0
        %1204 = vmatpush1.bf16.msra.mxu0 0
        %1205 = vmatprep.subr.bf16.mxu0 0
        %1206 = vmatpush1.bf16.msra.mxu0 0
        %1207 = vmatprep.subr.bf16.mxu0 0
        %1208 = vmatpush1.bf16.msra.mxu0 0
        %1209 = vmatprep.subr.bf16.mxu0 0
        %1210 = vmatpush1.bf16.msra.mxu0 0
        %1211 = vmatprep.subr.bf16.mxu0 0
        %1212 = vmatpush1.bf16.msra.mxu0 0
        %1213 = vmatprep.subr.bf16.mxu0 0
        %1214 = vmatpush1.bf16.msra.mxu0 0
        %1215 = vmatprep.subr.bf16.mxu0 0
        %1216 = vmatpush1.bf16.msra.mxu0 0
        %1217 = vmatprep.subr.bf16.mxu0 0
        %1218 = vmatpush1.bf16.msra.mxu0 0
        %1219 = vmatprep.subr.bf16.mxu0 0
        %1220 = vmatpush1.bf16.msra.mxu0 0
        %1221 = vmatprep.subr.bf16.mxu0 0
        %1222 = vmatpush1.bf16.msra.mxu0 0
        %1223 = vmatprep.subr.bf16.mxu0 0
        %1224 = vmatpush1.bf16.msra.mxu0 0
        %1225 = vmatprep.subr.bf16.mxu0 0
        %1226 = vmatpush1.bf16.msra.mxu0 0
        %1227 = vmatprep.mubr.bf16.mxu0 0
        %1228 = vmatmul.mubr.bf16.gmra.mrb[0].mxu0 %v1190
        %v1229 = vpop.f32.mrb[0].mxu0
        %v1230 = vadd.f32 0.0, %v1229
        %v1231 = vpop.f32.mrb[0].mxu0
        %v1232 = vpop.f32.mrb[0].mxu0
        %v1233 = vpop.f32.mrb[0].mxu0
        %1234 = vdwg.mxu0
        %v1235 = vadd.f32 %v1075, %v1230
        %v1236 = vsel %vm505, %v1235, 0.0
        %1237 = vadd.xlane.f32.xlu0 %v1236
        %v1238 = vpop.xlane.xlu0 %1237
        %v1239 = vmul.f32 %v1238, %v509
        %v1240 = vsub.f32 %v1235, %v1239
        %v1241 = vmul.f32 %v1240, %v1240
        %v1242 = vsel %vm505, %v1241, 0.0
        %1243 = vadd.xlane.f32.xlu0 %v1242
        %v1244 = vpop.xlane.xlu0 %1243
        %v1245 = vmul.f32 %v1244, %v509
        %v1246 = vadd.f32 %v1245, 1e-05
        %v1247 = vrsqrt.pop %v1246
        %v1248 = vmul.f32 %v1240, %v1247
        %v1249 = vpack.c.bf16 %v1248, %v1248
        %v1250 = vld [vmem:[%s484] sm:$0xf]
        %v1251 = vld [vmem:[%s484 + $0x4] sm:$0xf]
        %v1252 = vld [vmem:[%s484 + $0x8] sm:$0xf]
        %v1253 = vld [vmem:[%s484 + $0xc] sm:$0xf]
        %v1254 = vld [vmem:[%s487] sm:$0x1]
        %v1256 = vlaneseq
        %v1257 = vshrl.u32 %v1256, 7
        %v1258 = vsub.s32 0, %v1257
        %v1259 = vrot.slane %v1254, %v1258
        %v1265 = vunpack.c.l.b16 %v1250
        %v1266 = vunpack.c.l.b16 %v1251
        %v1267 = vunpack.c.l.b16 %v1252
        %v1268 = vunpack.c.l.b16 %v1253
        %v1269 = vpack.c.b16 %v1266, %v1265
        %v1270 = vpack.c.b16 %v1268, %v1267
        %v1274 = vsel %vm505, %v1249, 0
        %1276 = vmatprep.subr.bf16.mxu0 0
        %1277 = vmatpush1.bf16.msra.mxu0 %v1269
        %1278 = vmatprep.subr.bf16.mxu0 0
        %1279 = vmatpush1.bf16.msra.mxu0 %v1270
        %1280 = vmatprep.subr.bf16.mxu0 0
        %1281 = vmatpush1.bf16.msra.mxu0 0
        %1282 = vmatprep.subr.bf16.mxu0 0
        %1283 = vmatpush1.bf16.msra.mxu0 0
        %1284 = vmatprep.subr.bf16.mxu0 0
        %1285 = vmatpush1.bf16.msra.mxu0 0
        %1286 = vmatprep.subr.bf16.mxu0 0
        %1287 = vmatpush1.bf16.msra.mxu0 0
        %1288 = vmatprep.subr.bf16.mxu0 0
        %1289 = vmatpush1.bf16.msra.mxu0 0
        %1290 = vmatprep.subr.bf16.mxu0 0
        %1291 = vmatpush1.bf16.msra.mxu0 0
        %1292 = vmatprep.subr.bf16.mxu0 0
        %1293 = vmatpush1.bf16.msra.mxu0 0
        %1294 = vmatprep.subr.bf16.mxu0 0
        %1295 = vmatpush1.bf16.msra.mxu0 0
        %1296 = vmatprep.subr.bf16.mxu0 0
        %1297 = vmatpush1.bf16.msra.mxu0 0
        %1298 = vmatprep.subr.bf16.mxu0 0
        %1299 = vmatpush1.bf16.msra.mxu0 0
        %1300 = vmatprep.subr.bf16.mxu0 0
        %1301 = vmatpush1.bf16.msra.mxu0 0
        %1302 = vmatprep.subr.bf16.mxu0 0
        %1303 = vmatpush1.bf16.msra.mxu0 0
        %1304 = vmatprep.subr.bf16.mxu0 0
        %1305 = vmatpush1.bf16.msra.mxu0 0
        %1306 = vmatprep.subr.bf16.mxu0 0
        %1307 = vmatpush1.bf16.msra.mxu0 0
        %1308 = vmatprep.mubr.bf16.mxu0 0
        %1309 = vmatmul.mubr.bf16.gmra.mrb[0].mxu0 %v1274
        %v1310 = vpop.f32.mrb[0].mxu0
        %v1311 = vadd.f32 %v1259, %v1310
        %v1312 = vpop.f32.mrb[0].mxu0
        %v1313 = vpop.f32.mrb[0].mxu0
        %v1314 = vpop.f32.mrb[0].mxu0
        %1315 = vdwg.mxu0
        %v1316 = vmul.f32 %v1311, %v1311
        %v1317 = vmul.f32 %v1316, %v1311
        %v1318 = vmul.f32 %v1311, 0.5
        %v1319 = vmul.f32 %v1317, 0.044715
        %v1320 = vadd.f32 %v1311, %v1319
        %v1321 = vmul.f32 %v1320, 0.7978846
        %v1322 = vtanh.pop %v1321
        %v1323 = vadd.f32 %v1322, 1.0
        %v1324 = vmul.f32 %v1318, %v1323
        %v1325 = vpack.c.bf16 %v1324, %v1324
        %v1326 = vld [vmem:[%s492] sm:$0xf]
        %v1327 = vld [vmem:[%s492 + $0x4] sm:$0xf]
        %v1328 = vld [vmem:[%s492 + $0x8] sm:$0xf]
        %v1329 = vld [vmem:[%s492 + $0xc] sm:$0xf]
        %v1330 = vld [vmem:[%s492 + $0x10] sm:$0xf]
        %v1331 = vld [vmem:[%s492 + $0x14] sm:$0xf]
        %v1332 = vld [vmem:[%s492 + $0x18] sm:$0xf]
        %v1333 = vld [vmem:[%s492 + $0x1c] sm:$0xf]
        %v1334 = vld [vmem:[%s495] sm:$0x1]
        %v1336 = vlaneseq
        %v1337 = vshrl.u32 %v1336, 7
        %v1338 = vsub.s32 0, %v1337
        %v1339 = vrot.slane %v1334, %v1338
        %v1349 = vunpack.c.l.b16 %v1326
        %v1350 = vunpack.c.l.b16 %v1327
        %v1351 = vunpack.c.l.b16 %v1328
        %v1352 = vunpack.c.l.b16 %v1329
        %v1353 = vunpack.c.l.b16 %v1330
        %v1354 = vunpack.c.l.b16 %v1331
        %v1355 = vunpack.c.l.b16 %v1332
        %v1356 = vunpack.c.l.b16 %v1333
        %v1357 = vpack.c.b16 %v1350, %v1349
        %v1358 = vpack.c.b16 %v1352, %v1351
        %v1359 = vpack.c.b16 %v1354, %v1353
        %v1360 = vpack.c.b16 %v1356, %v1355
        %vm1365 = vcmask 523264
        %v1367 = vsel %vm1365, %v1325, 0
        %1369 = vmatprep.subr.bf16.mxu0 0
        %1370 = vmatpush1.bf16.msra.mxu0 %v1357
        %1371 = vmatprep.subr.bf16.mxu0 0
        %1372 = vmatpush1.bf16.msra.mxu0 %v1358
        %1373 = vmatprep.subr.bf16.mxu0 0
        %1374 = vmatpush1.bf16.msra.mxu0 %v1359
        %1375 = vmatprep.subr.bf16.mxu0 0
        %1376 = vmatpush1.bf16.msra.mxu0 %v1360
        %1377 = vmatprep.subr.bf16.mxu0 0
        %1378 = vmatpush1.bf16.msra.mxu0 0
        %1379 = vmatprep.subr.bf16.mxu0 0
        %1380 = vmatpush1.bf16.msra.mxu0 0
        %1381 = vmatprep.subr.bf16.mxu0 0
        %1382 = vmatpush1.bf16.msra.mxu0 0
        %1383 = vmatprep.subr.bf16.mxu0 0
        %1384 = vmatpush1.bf16.msra.mxu0 0
        %1385 = vmatprep.subr.bf16.mxu0 0
        %1386 = vmatpush1.bf16.msra.mxu0 0
        %1387 = vmatprep.subr.bf16.mxu0 0
        %1388 = vmatpush1.bf16.msra.mxu0 0
        %1389 = vmatprep.subr.bf16.mxu0 0
        %1390 = vmatpush1.bf16.msra.mxu0 0
        %1391 = vmatprep.subr.bf16.mxu0 0
        %1392 = vmatpush1.bf16.msra.mxu0 0
        %1393 = vmatprep.subr.bf16.mxu0 0
        %1394 = vmatpush1.bf16.msra.mxu0 0
        %1395 = vmatprep.subr.bf16.mxu0 0
        %1396 = vmatpush1.bf16.msra.mxu0 0
        %1397 = vmatprep.subr.bf16.mxu0 0
        %1398 = vmatpush1.bf16.msra.mxu0 0
        %1399 = vmatprep.subr.bf16.mxu0 0
        %1400 = vmatpush1.bf16.msra.mxu0 0
        %1401 = vmatprep.mubr.bf16.mxu0 0
        %1402 = vmatmul.mubr.bf16.gmra.mrb[0].mxu0 %v1367
        %v1403 = vpop.f32.mrb[0].mxu0
        %v1404 = vadd.f32 %v1339, %v1403
        %v1405 = vpop.f32.mrb[0].mxu0
        %v1406 = vpop.f32.mrb[0].mxu0
        %v1407 = vpop.f32.mrb[0].mxu0
        %1408 = vdwg.mxu0
        %v1409 = vadd.f32 %v1235, %v1404
        %1410 = vst.msk [vmem:[#allocation2] sm:$0xff] %vm505, %v1409
        %p1411 = scmp.eq.s32.totalorder %s31, 1
        // Predicated region
        $region65: #{tpu_custom_call.1} parent=55 // pred_check
          %p1412 = pneg %p1411
        $region66: #{tpu_custom_call.1} parent=55 // pred_check_branch
          %1414 = sbr.rel (%p1412) target = $region68
        $region67: #{tpu_custom_call.1} parent=55 // pred_region
          %1415 = vst.msk [vmem:[%s463] sm:$0xff] %vm505, %v1409
        $region68: #{tpu_custom_call.1} parent=55 // pred_fallthru
          _
        %s1416 = sand.u32 %s280, 1
        %s1417 = scalar_lea.sflag [#allocation5], %s1416
        %s1418 = sand.u32 %s280, 1
        %s1419 = smul.addr %s1418, 8
        %s1420 = scalar_lea.vmem [#allocation6], %s1419
        // Predicated region
        $region69: #{tpu_custom_call.1} parent=55 // pred_check
          %p1421 = pneg %p290
        $region70: #{tpu_custom_call.1} parent=55 // pred_check_branch
          %1423 = sbr.rel (%p1421) target = $region72
        $region71: #{tpu_custom_call.1} parent=55 // pred_region
          %s1425 = ssub.s32 128, 128
          %1426 = vsyncadd %s1417, %s1425
          %s1427 = smul.addr %s30, 128
          %s1428 = scalar_lea.hbm %s9, %s1427
          %s1430 = sshll.u32 %s1420, 4
          %s1431 = int_to_ptr.vmem [resolvable:$true] %s1430
          %1433 = dma.vmem_to_hbm [thread:$0]  %s1431, 128, %s1428, %s1417
        $region72: #{tpu_custom_call.1} parent=55 // pred_fallthru
          _
      $region56: #{tpu_custom_call.1} parent=5 // pred_fallthru
        _
      %p1434 = scmp.le.s32.totalorder 2, %s21
      // Predicated region
      $region73: #{tpu_custom_call.1} parent=5 // pred_check
        %p1435 = pneg %p1434
      $region74: #{tpu_custom_call.1} parent=5 // pred_check_branch
        %1437 = sbr.rel (%p1435) target = $region76
      $region75: #{tpu_custom_call.1} parent=5 // pred_region
        %s1438 = ssub.s32 %s21, 2
        // Predicated region
        $region77: #{tpu_custom_call.1} parent=75 // pred_check
          %p1439 = pneg %p296
        $region78: #{tpu_custom_call.1} parent=75 // pred_check_branch
          %1441 = sbr.rel (%p1439) target = $region80
        $region79: #{tpu_custom_call.1} parent=75 // pred_region
          %s1442 = sand.u32 %s281, 1
          %s1443 = scalar_lea.sflag [#allocation5], %s1442
          %s1444 = sand.u32 %s281, 1
          %s1445 = smul.addr %s1444, 8
          %s1446 = scalar_lea.vmem [#allocation6], %s1445
          %1447 = dma.done %s1443, 128
        $region80: #{tpu_custom_call.1} parent=75 // pred_fallthru
          _
      $region76: #{tpu_custom_call.1} parent=5 // pred_fallthru
        _
    $region6: #{tpu_custom_call.1} parent=1 // loop_footer
      %s25 = sadd.s32 1, %s21
    $region7: #{tpu_custom_call.1} parent=1 // loop_footer_branch
      %20 = sbr.rel target = $region3
    $region8: #{tpu_custom_call.1} parent=1 // loop_exit
      _
    %1448 = vsyncpa [#allocation4], 1
    %s1449 = scalar_lea.sflag [#allocation4], 1
    %1450 = vsyncpa %s1449, 1
    %1451 = vsyncpa [#allocation5], 1
    %s1452 = scalar_lea.sflag [#allocation5], 1
    %1453 = vsyncpa %s1452, 1

</llo_original>
